<compile_context>
chip_gen: v6e
topology: v6e:2x2x1
jax: 0.10.0
libtpu: 0.0.40
codegen_flags: <defaults>
</compile_context>

<pallas_src>
import functools
import math

import jax
import jax.numpy as jnp
from jax.experimental import pallas as pl
from jax.experimental.pallas import tpu as pltpu

_LN_EPS = 1e-5
_MASK_VALUE = -1.0e30  # large finite: identical to -inf softmax when >=1 valid key


# --------------------------------------------------------------------------
# Small helpers (tiling, compiler params, feature probes)
# --------------------------------------------------------------------------

_VMEM_CACHE = []


def _vmem_limit_bytes():
    if not _VMEM_CACHE:
        try:
            cap = int(pltpu.get_tpu_info().vmem_capacity_bytes)
        except Exception:
            cap = 64 * 1024 * 1024
        # ~7/8 of physical VMEM, capped: ~56 MiB on v7x, 112 MiB on v5e/v6e.
        _VMEM_CACHE.append(max(32 << 20, min((cap * 7) // 8, 112 << 20)))
    return _VMEM_CACHE[0]


def _compiler_params(sem):
    return pltpu.CompilerParams(
        dimension_semantics=sem, vmem_limit_bytes=_vmem_limit_bytes())


def _row_tile(rows, max_tile=256):
    """Largest multiple-of-8 divisor of `rows` <= max_tile, preferring >=4
    grid steps (v7x megacore + pipelining), then >=2, else the full extent."""
    cands = [t for t in range(8, min(max_tile, rows) + 1, 8) if rows % t == 0]
    if not cands:
        return rows
    for min_steps in (4, 2):
        pref = [t for t in cands if rows // t >= min_steps]
        if pref:
            return max(pref)
    return max(cands)


def _inner_tile(inner, max_tile=1024):
    """Multiple-of-128 divisor of the FFN inner dim (bounds resident weights)."""
    cands = [t for t in range(128, min(max_tile, inner) + 1, 128)
             if inner % t == 0]
    return max(cands) if cands else inner


def _head_group(heads, batch, n, m):
    """Heads processed per grid step: keep >=4 grid steps when possible and
    bound the f32 (hg, N, M) score tile to ~8 MiB."""
    hg = heads
    while hg > 1 and hg % 2 == 0 and batch * (heads // hg) < 4:
        hg //= 2
    while hg > 1 and hg % 2 == 0 and hg * n * m * 4 > (8 << 20):
        hg //= 2
    return hg


_BUFFERED_CACHE = []


def _probe_buffered_one():
    """Check pl.Buffered(1) (no double-buffering for block-invariant operands)
    compiles & runs on this runtime; fall back silently if not."""
    try:
        mode = pl.Buffered(1)

        def _k(x_ref, c_ref, o_ref):
            o_ref[...] = x_ref[...] + c_ref[...]

        fn = pl.pallas_call(
            _k,
            out_shape=jax.ShapeDtypeStruct((8, 128), jnp.float32),
            grid_spec=pltpu.PrefetchScalarGridSpec(
                num_scalar_prefetch=0,
                grid=(2,),
                in_specs=[
                    pl.BlockSpec((8, 128), lambda i: (0, 0)),
                    pl.BlockSpec((8, 128), lambda i: (0, 0), pipeline_mode=mode),
                ],
                out_specs=pl.BlockSpec((8, 128), lambda i: (0, 0)),
            ),
        )
        jax.block_until_ready(fn(jnp.zeros((8, 128), jnp.float32),
                                 jnp.ones((8, 128), jnp.float32)))
        return mode
    except Exception:
        return None


def _const_kwargs():
    if not _BUFFERED_CACHE:
        _BUFFERED_CACHE.append(_probe_buffered_one())
    mode = _BUFFERED_CACHE[0]
    return {} if mode is None else {"pipeline_mode": mode}


# --------------------------------------------------------------------------
# Fused pre-LN + projection(s) + per-head LayerNorm kernel
# --------------------------------------------------------------------------

def _fused_proj_kernel(x_ref, lng_ref, lnb_ref, w_ref, b_ref, avg_ref,
                       hg_ref, hb_ref, o_ref, *, d, n_chunks, n_ln_chunks,
                       pre_ln):
    x = x_ref[...].astype(jnp.float32)
    if pre_ln:
        mu = jnp.mean(x, axis=-1, keepdims=True)
        var = jnp.mean(jnp.square(x - mu), axis=-1, keepdims=True)
        xn = (x - mu) * jax.lax.rsqrt(var + _LN_EPS) * lng_ref[...] + lnb_ref[...]
    else:
        xn = x

    # bf16 MXU matmul, f32 accumulation.
    y = jnp.dot(xn.astype(jnp.bfloat16), w_ref[...],
                preferred_element_type=jnp.float32) + b_ref[...]

    # Block-diagonal averaging matrix: per-head mean broadcast on the
    # lane-dense (rows, D) layout (no dh-minor reshapes).
    avg = avg_ref[...]
    for c in range(n_chunks):
        t = y[:, c * d:(c + 1) * d]
        if c < n_ln_chunks:
            mu_h = jnp.dot(t, avg, preferred_element_type=jnp.float32)
            tc = t - mu_h
            var_h = jnp.dot(tc * tc, avg, preferred_element_type=jnp.float32)
            t = (tc * jax.lax.rsqrt(var_h + _LN_EPS)
                 * hg_ref[:, c * d:(c + 1) * d]
                 + hb_ref[:, c * d:(c + 1) * d])
        o_ref[:, c * d:(c + 1) * d] = t.astype(o_ref.dtype)


def fused_ln_proj(x2, lng, lnb, w, b, avg, hg, hb, *, d, n_chunks,
                  n_ln_chunks, pre_ln, out_dtype):
    rows = x2.shape[0]
    tr = _row_tile(rows)
    nout = n_chunks * d
    nln = max(n_ln_chunks, 1) * d
    cw = _const_kwargs()
    kern = functools.partial(_fused_proj_kernel, d=d, n_chunks=n_chunks,
                             n_ln_chunks=n_ln_chunks, pre_ln=pre_ln)
    return pl.pallas_call(
        kern,
        out_shape=jax.ShapeDtypeStruct((rows, nout), out_dtype),
        grid_spec=pltpu.PrefetchScalarGridSpec(
            num_scalar_prefetch=0,
            grid=(rows // tr,),
            in_specs=[
                pl.BlockSpec((tr, d), lambda i: (i, 0)),
                pl.BlockSpec((1, d), lambda i: (0, 0), **cw),
                pl.BlockSpec((1, d), lambda i: (0, 0), **cw),
                pl.BlockSpec((d, nout), lambda i: (0, 0), **cw),
                pl.BlockSpec((1, nout), lambda i: (0, 0), **cw),
                pl.BlockSpec((d, d), lambda i: (0, 0), **cw),
                pl.BlockSpec((1, nln), lambda i: (0, 0), **cw),
                pl.BlockSpec((1, nln), lambda i: (0, 0), **cw),
            ],
            out_specs=pl.BlockSpec((tr, nout), lambda i: (i, 0)),
        ),
        compiler_params=_compiler_params(("parallel",)),
    )(x2, lng, lnb, w, b, avg, hg, hb)


# --------------------------------------------------------------------------
# Attention core (batch x head-group grid, masked softmax)
# --------------------------------------------------------------------------

def _attn_kernel(q_ref, k_ref, v_ref, m_ref, o_ref):
    q = q_ref[0]                       # (hg, N, dh) bf16, already LN'd+scaled
    k = k_ref[0]                       # (hg, M, dh) bf16, already LN'd
    v = v_ref[0]                       # (hg, M, dh) bf16

    sim = jnp.einsum("hid,hjd->hij", q, k,
                     preferred_element_type=jnp.float32)      # (hg, N, M) f32
    valid = m_ref[0] > 0                                      # (1, M)
    sim = jnp.where(valid[None], sim, _MASK_VALUE)

    m_max = jnp.max(sim, axis=-1, keepdims=True)
    p = jnp.exp(sim - m_max)
    attn = p * pl.reciprocal(jnp.sum(p, axis=-1, keepdims=True), approx=True)

    out = jnp.einsum("hij,hjd->hid", attn.astype(v.dtype), v,
                     preferred_element_type=jnp.float32)
    o_ref[0] = out.astype(o_ref.dtype)


def attention_core(q4, k4, v4, mask3):
    B, H, N, dh = q4.shape
    M = k4.shape[2]
    hg = _head_group(H, B, N, M)
    return pl.pallas_call(
        _attn_kernel,
        out_shape=jax.ShapeDtypeStruct((B, H, N, dh), q4.dtype),
        grid_spec=pltpu.PrefetchScalarGridSpec(
            num_scalar_prefetch=0,
            grid=(B, H // hg),
            in_specs=[
                pl.BlockSpec((1, hg, N, dh), lambda b, g: (b, g, 0, 0)),
                pl.BlockSpec((1, hg, M, dh), lambda b, g: (b, g, 0, 0)),
                pl.BlockSpec((1, hg, M, dh), lambda b, g: (b, g, 0, 0)),
                pl.BlockSpec((1, 1, M), lambda b, g: (b, 0, 0)),
            ],
            out_specs=pl.BlockSpec((1, hg, N, dh), lambda b, g: (b, g, 0, 0)),
        ),
        compiler_params=_compiler_params(("parallel", "parallel")),
    )(q4, k4, v4, mask3)


# --------------------------------------------------------------------------
# Fused Wo + attention residual + FFN (inner-dim tiled SwiGLU) + FFN residual
# --------------------------------------------------------------------------

def _out_ffn_kernel(a_ref, wo_ref, x_ref, g_ref, b_ref, w1_ref, b1_ref,
                    w3_ref, b3_ref, w2_ref, b2_ref, o_ref,
                    h_sc, hn_sc, acc_sc):
    j = pl.program_id(1)

    @pl.when(j == 0)
    def _():
        # attention output projection (no bias) + attention residual
        h = jnp.dot(a_ref[...], wo_ref[...],
                    preferred_element_type=jnp.float32) + x_ref[...].astype(jnp.float32)
        h_sc[...] = h
        mu = jnp.mean(h, axis=-1, keepdims=True)
        var = jnp.mean(jnp.square(h - mu), axis=-1, keepdims=True)
        hn = (h - mu) * jax.lax.rsqrt(var + _LN_EPS) * g_ref[...] + b_ref[...]
        hn_sc[...] = hn.astype(hn_sc.dtype)
        acc_sc[...] = jnp.zeros_like(acc_sc)

    hn = hn_sc[...]                                       # bf16 (tr, D)
    h1 = jnp.dot(hn, w1_ref[...], preferred_element_type=jnp.float32) + b1_ref[...]
    h3 = jnp.dot(hn, w3_ref[...], preferred_element_type=jnp.float32) + b3_ref[...]
    inner = h1 * pl.reciprocal(1.0 + jnp.exp(-h1), approx=True) * h3  # silu*gate
    acc_sc[...] += jnp.dot(inner.astype(jnp.bfloat16), w2_ref[...],
                           preferred_element_type=jnp.float32)

    @pl.when(j == pl.num_programs(1) - 1)
    def _():
        o_ref[...] = (acc_sc[...] + b2_ref[...] + h_sc[...]).astype(o_ref.dtype)


def out_ffn_block(a2, wo, x2, g, b, w1, b1, w3, b3, w2, b2, out_dtype):
    rows, d = x2.shape
    inner = w1.shape[1]
    tr = _row_tile(rows)
    ti = _inner_tile(inner)
    cw = _const_kwargs()
    return pl.pallas_call(
        _out_ffn_kernel,
        out_shape=jax.ShapeDtypeStruct((rows, d), out_dtype),
        grid_spec=pltpu.PrefetchScalarGridSpec(
            num_scalar_prefetch=0,
            grid=(rows // tr, inner // ti),
            in_specs=[
                pl.BlockSpec((tr, d), lambda i, j: (i, 0)),           # attn out
                pl.BlockSpec((d, d), lambda i, j: (0, 0), **cw),      # Wo
                pl.BlockSpec((tr, d), lambda i, j: (i, 0)),           # residual x
                pl.BlockSpec((1, d), lambda i, j: (0, 0), **cw),      # ffn LN g
                pl.BlockSpec((1, d), lambda i, j: (0, 0), **cw),      # ffn LN b
                pl.BlockSpec((d, ti), lambda i, j: (0, j)),           # W1 tile
                pl.BlockSpec((1, ti), lambda i, j: (0, j)),           # b1 tile
                pl.BlockSpec((d, ti), lambda i, j: (0, j)),           # W3 tile
                pl.BlockSpec((1, ti), lambda i, j: (0, j)),           # b3 tile
                pl.BlockSpec((ti, d), lambda i, j: (j, 0)),           # W2 tile
                pl.BlockSpec((1, d), lambda i, j: (0, 0), **cw),      # b2
            ],
            out_specs=pl.BlockSpec((tr, d), lambda i, j: (i, 0)),
            scratch_shapes=[
                pltpu.VMEM((tr, d), jnp.float32),    # h (post-attn residual)
                pltpu.VMEM((tr, d), jnp.bfloat16),   # LN(h) in bf16
                pltpu.VMEM((tr, d), jnp.float32),    # FFN accumulator
            ],
        ),
        compiler_params=_compiler_params(("parallel", "arbitrary")),
    )(a2, wo, x2, g, b, w1, b1, w3, b3, w2, b2)


# --------------------------------------------------------------------------
# Full block wrapper
# --------------------------------------------------------------------------

def transformer_block(x, params, attention_mask=None, context=None):
    """Pallas forward of CheckpointedTransformerBlock."""
    B, N, D = x.shape
    H = params["heads"]
    dh = D // H
    scale = dh ** (-0.5)
    cdt = jnp.bfloat16  # handoff / matmul-operand dtype

    x2 = x.reshape(B * N, D)

    # per-head averaging matrix (block-diagonal, 1/dh) for head-LN stats.
    avg = (jnp.kron(jnp.eye(H, dtype=jnp.float32),
                    jnp.ones((dh, dh), jnp.float32)) / dh)

    # tile head-LN params to model width; fold q scale into gamma/beta.
    qg = jnp.tile(params["qn_g"].astype(jnp.float32), H) * scale
    qb = jnp.tile(params["qn_b"].astype(jnp.float32), H) * scale
    kg = jnp.tile(params["kn_g"].astype(jnp.float32), H)
    kb = jnp.tile(params["kn_b"].astype(jnp.float32), H)

    lng = params["attn_norm_g"].astype(jnp.float32)[None, :]
    lnb = params["attn_norm_b"].astype(jnp.float32)[None, :]

    if context is None:
        # Self-attention: fused LN + [Wq|Wk|Wv] + head-LN(q,k) + q-scale.
        M = N
        w_qkv = jnp.concatenate(
            [params["wq"], params["wk"], params["wv"]], axis=1).astype(cdt)
        b_qkv = jnp.concatenate(
            [params["bq"], params["bk"], params["bv"]]).astype(jnp.float32)[None, :]
        hg = jnp.concatenate([qg, kg])[None, :]
        hb = jnp.concatenate([qb, kb])[None, :]
        qkv2 = fused_ln_proj(x2, lng, lnb, w_qkv, b_qkv, avg, hg, hb,
                             d=D, n_chunks=3, n_ln_chunks=2, pre_ln=True,
                             out_dtype=cdt)
        q2, k2, v2 = qkv2[:, :D], qkv2[:, D:2 * D], qkv2[:, 2 * D:]
    else:
        # Cross-attention: q from LN(x); k,v from raw context (no pre-LN).
        M = context.shape[1]
        ctx2 = context.reshape(B * M, D)
        q2 = fused_ln_proj(
            x2, lng, lnb, params["wq"].astype(cdt),
            params["bq"].astype(jnp.float32)[None, :], avg,
            qg[None, :], qb[None, :],
            d=D, n_chunks=1, n_ln_chunks=1, pre_ln=True, out_dtype=cdt)
        w_kv = jnp.concatenate([params["wk"], params["wv"]], axis=1).astype(cdt)
        b_kv = jnp.concatenate(
            [params["bk"], params["bv"]]).astype(jnp.float32)[None, :]
        dummy = jnp.zeros((1, D), jnp.float32)
        kv2 = fused_ln_proj(ctx2, dummy, dummy, w_kv, b_kv, avg,
                            kg[None, :], kb[None, :],
                            d=D, n_chunks=2, n_ln_chunks=1, pre_ln=False,
                            out_dtype=cdt)
        k2, v2 = kv2[:, :D], kv2[:, D:]

    # head split: bf16 layout plumbing only (half the bytes of the f32 path).
    q4 = q2.reshape(B, N, H, dh).transpose(0, 2, 1, 3)
    k4 = k2.reshape(B, M, H, dh).transpose(0, 2, 1, 3)
    v4 = v2.reshape(B, M, H, dh).transpose(0, 2, 1, 3)

    if attention_mask is None:
        mask3 = jnp.ones((B, 1, M), dtype=jnp.int32)
    else:
        mask3 = attention_mask.astype(jnp.int32).reshape(B, 1, M)

    out4 = attention_core(q4, k4, v4, mask3)               # (B,H,N,dh) bf16
    out2 = out4.transpose(0, 2, 1, 3).reshape(B * N, D)    # merge heads

    y2 = out_ffn_block(
        out2, params["wo"].astype(cdt), x2,
        params["ffn_norm_g"].astype(jnp.float32)[None, :],
        params["ffn_norm_b"].astype(jnp.float32)[None, :],
        params["w1"].astype(cdt), params["b1"].astype(jnp.float32)[None, :],
        params["w3"].astype(cdt), params["b3"].astype(jnp.float32)[None, :],
        params["w2"].astype(cdt), params["b2"].astype(jnp.float32)[None, :],
        out_dtype=x.dtype)
    return y2.reshape(B, N, D)


# --------------------------------------------------------------------------
# Pure-JAX reference (f32, HIGHEST precision)
# --------------------------------------------------------------------------

def _ln_ref(x, g, b):
    mu = jnp.mean(x, axis=-1, keepdims=True)
    var = jnp.mean(jnp.square(x - mu), axis=-1, keepdims=True)
    return (x - mu) / jnp.sqrt(var + _LN_EPS) * g + b


def transformer_block_ref(x, params, attention_mask=None, context=None):
    hi = jax.lax.Precision.HIGHEST
    B, N, D = x.shape
    H = params["heads"]
    dh = D // H
    xn = _ln_ref(x, params["attn_norm_g"], params["attn_norm_b"])
    ctx = xn if context is None else context
    M = ctx.shape[1]
    q = jnp.matmul(xn, params["wq"], precision=hi) + params["bq"]
    k = jnp.matmul(ctx, params["wk"], precision=hi) + params["bk"]
    v = jnp.matmul(ctx, params["wv"], precision=hi) + params["bv"]
    q = q.reshape(B, N, H, dh).transpose(0, 2, 1, 3)
    k = k.reshape(B, M, H, dh).transpose(0, 2, 1, 3)
    v = v.reshape(B, M, H, dh).transpose(0, 2, 1, 3)
    q = _ln_ref(q, params["qn_g"], params["qn_b"]) * (dh ** -0.5)
    k = _ln_ref(k, params["kn_g"], params["kn_b"])
    sim = jnp.einsum("bhid,bhjd->bhij", q, k, precision=hi)
    if attention_mask is not None:
        sim = jnp.where(attention_mask[:, None, None, :], sim, -jnp.inf)
    attn = jax.nn.softmax(sim, axis=-1)
    out = jnp.einsum("bhij,bhjd->bhid", attn, v, precision=hi)
    out = out.transpose(0, 2, 1, 3).reshape(B, N, D)
    x = jnp.matmul(out, params["wo"], precision=hi) + x
    hn = _ln_ref(x, params["ffn_norm_g"], params["ffn_norm_b"])
    h1 = jnp.matmul(hn, params["w1"], precision=hi) + params["b1"]
    h3 = jnp.matmul(hn, params["w3"], precision=hi) + params["b3"]
    y = jnp.matmul(jax.nn.silu(h1) * h3, params["w2"], precision=hi) + params["b2"]
    return y + x


# --------------------------------------------------------------------------
# Demo
# --------------------------------------------------------------------------

if __name__ == "__main__":
    B, N, D, H = 2, 8, 128, 16          # dim_head = 8, FFN inner = 512
    dh = D // H
    inner = 4 * D

    key = jax.random.PRNGKey(0)
    ks = jax.random.split(key, 22)

    def w(k, shape, s=0.05):
        return s * jax.random.normal(k, shape, dtype=jnp.float32)

    params = dict(
        heads=H,
        attn_norm_g=1.0 + w(ks[0], (D,)), attn_norm_b=w(ks[1], (D,)),
        wq=w(ks[2], (D, D)), bq=w(ks[3], (D,)),
        wk=w(ks[4], (D, D)), bk=w(ks[5], (D,)),
        wv=w(ks[6], (D, D)), bv=w(ks[7], (D,)),
        wo=w(ks[8], (D, D)),
        qn_g=1.0 + w(ks[9], (dh,)), qn_b=w(ks[10], (dh,)),
        kn_g=1.0 + w(ks[11], (dh,)), kn_b=w(ks[12], (dh,)),
        ffn_norm_g=1.0 + w(ks[13], (D,)), ffn_norm_b=w(ks[14], (D,)),
        w1=w(ks[15], (D, inner)), b1=w(ks[16], (inner,)),
        w3=w(ks[17], (D, inner)), b3=w(ks[18], (inner,)),
        w2=w(ks[19], (inner, D)), b2=w(ks[20], (D,)),
    )
    x = jax.random.normal(ks[21], (B, N, D), dtype=jnp.float32)
    attention_mask = jnp.array(
        [[1, 1, 1, 1, 1, 1, 0, 0],
         [1, 1, 1, 1, 1, 1, 1, 1]], dtype=bool)

    out = transformer_block(x, params, attention_mask=attention_mask, context=None)
    out = jax.block_until_ready(out)

    ref = transformer_block_ref(x, params, attention_mask=attention_mask, context=None)
    assert out.shape == x.shape
    err = float(jnp.max(jnp.abs(out - ref)))
    assert err < 5e-2, f"mismatch vs reference: max abs err = {err}"

    print("KERNEL_OK")
</pallas_src>

<mosaic_0001>
module attributes {stable_mosaic.version = 11 : i64} {
  func.func @_k(%arg0: i32, %arg1: memref<8x128xf32, #tpu.memory_space<vmem>>, %arg2: memref<8x128xf32, #tpu.memory_space<vmem>>, %arg3: memref<8x128xf32, #tpu.memory_space<vmem>>) attributes {dimension_semantics = [#tpu.dimension_semantics<arbitrary>], iteration_bounds = array<i64: 2>, scalar_prefetch = 0 : i64, scratch_operands = 0 : i64, tpu.core_type = #tpu.core_type<tc>, window_params = [{pipeline_mode = #tpu.pipeline_mode<synchronous>, transform_indices = @transform_0, window_bounds = array<i64: 8, 128>}, {pipeline_mode = #tpu.pipeline_mode<synchronous>, transform_indices = @transform_1, window_bounds = array<i64: 8, 128>}, {pipeline_mode = #tpu.pipeline_mode<synchronous>, transform_indices = @transform_2, window_bounds = array<i64: 8, 128>}]} {
    %c0 = arith.constant 0 : index
    %c0_0 = arith.constant 0 : index
    %0 = vector.load %arg1[%c0, %c0_0] : memref<8x128xf32, #tpu.memory_space<vmem>>, vector<8x128xf32>
    %c0_1 = arith.constant 0 : index
    %c0_2 = arith.constant 0 : index
    %1 = vector.load %arg2[%c0_1, %c0_2] : memref<8x128xf32, #tpu.memory_space<vmem>>, vector<8x128xf32>
    %2 = arith.addf %0, %1 : vector<8x128xf32>
    %c0_3 = arith.constant 0 : index
    %c0_4 = arith.constant 0 : index
    %3 = vector.load %arg3[%c0_3, %c0_4] : memref<8x128xf32, #tpu.memory_space<vmem>>, vector<8x128xf32>
    tpu.vector_store %arg3[%c0_3, %c0_4], %2 {strides = array<i32>} : memref<8x128xf32, #tpu.memory_space<vmem>>, vector<8x128xf32>,
    return
  }
  func.func @transform_0(%arg0: i32) -> (i32, i32) {
    %c0_i32 = arith.constant 0 : i32
    %c0_i32_0 = arith.constant 0 : i32
    %c0_i32_1 = arith.constant 0 : i32
    return %c0_i32, %c0_i32_0 : i32, i32
  }
  func.func @transform_1(%arg0: i32) -> (i32, i32) {
    %c0_i32 = arith.constant 0 : i32
    %c0_i32_0 = arith.constant 0 : i32
    %c0_i32_1 = arith.constant 0 : i32
    return %c0_i32, %c0_i32_0 : i32, i32
  }
  func.func @transform_2(%arg0: i32) -> (i32, i32) {
    %c0_i32 = arith.constant 0 : i32
    %c0_i32_0 = arith.constant 0 : i32
    %c0_i32_1 = arith.constant 0 : i32
    return %c0_i32, %c0_i32_0 : i32, i32
  }
}

module attributes {stable_mosaic.version = 11 : i64} {
  func.func @_fused_proj_kernel(%arg0: i32, %arg1: memref<8x128xf32, #tpu.memory_space<vmem>>, %arg2: memref<1x128xf32, #tpu.memory_space<vmem>>, %arg3: memref<1x128xf32, #tpu.memory_space<vmem>>, %arg4: memref<128x384xbf16, #tpu.memory_space<vmem>>, %arg5: memref<1x384xf32, #tpu.memory_space<vmem>>, %arg6: memref<128x128xf32, #tpu.memory_space<vmem>>, %arg7: memref<1x256xf32, #tpu.memory_space<vmem>>, %arg8: memref<1x256xf32, #tpu.memory_space<vmem>>, %arg9: memref<8x384xbf16, #tpu.memory_space<vmem>>) attributes {dimension_semantics = [#tpu.dimension_semantics<parallel>], iteration_bounds = array<i64: 2>, scalar_prefetch = 0 : i64, scratch_operands = 0 : i64, tpu.core_type = #tpu.core_type<tc>, window_params = [{transform_indices = @transform_0, window_bounds = array<i64: 8, 128>}, {pipeline_mode = #tpu.pipeline_mode<synchronous>, transform_indices = @transform_1, window_bounds = array<i64: 1, 128>}, {pipeline_mode = #tpu.pipeline_mode<synchronous>, transform_indices = @transform_2, window_bounds = array<i64: 1, 128>}, {pipeline_mode = #tpu.pipeline_mode<synchronous>, transform_indices = @transform_3, window_bounds = array<i64: 128, 384>}, {pipeline_mode = #tpu.pipeline_mode<synchronous>, transform_indices = @transform_4, window_bounds = array<i64: 1, 384>}, {pipeline_mode = #tpu.pipeline_mode<synchronous>, transform_indices = @transform_5, window_bounds = array<i64: 128, 128>}, {pipeline_mode = #tpu.pipeline_mode<synchronous>, transform_indices = @transform_6, window_bounds = array<i64: 1, 256>}, {pipeline_mode = #tpu.pipeline_mode<synchronous>, transform_indices = @transform_7, window_bounds = array<i64: 1, 256>}, {transform_indices = @transform_8, window_bounds = array<i64: 8, 384>}]} {
    %c0 = arith.constant 0 : index
    %c0_0 = arith.constant 0 : index
    %0 = vector.load %arg1[%c0, %c0_0] : memref<8x128xf32, #tpu.memory_space<vmem>>, vector<8x128xf32>
    %cst = arith.constant dense<0.000000e+00> : vector<8xf32>
    %1 = vector.multi_reduction <add>, %0, %cst [1] : vector<8x128xf32> to vector<8xf32>
    %2 = vector.shape_cast %1 : vector<8xf32> to vector<8x1xf32>
    %cst_1 = arith.constant 1.280000e+02 : f32
    %3 = vector.broadcast %cst_1 : f32 to vector<8x1xf32>
    %4 = arith.divf %2, %3 : vector<8x1xf32>
    %5 = vector.broadcast %4 : vector<8x1xf32> to vector<8x128xf32>
    %6 = arith.subf %0, %5 : vector<8x128xf32>
    %7 = arith.mulf %6, %6 : vector<8x128xf32>
    %cst_2 = arith.constant dense<0.000000e+00> : vector<8xf32>
    %8 = vector.multi_reduction <add>, %7, %cst_2 [1] : vector<8x128xf32> to vector<8xf32>
    %9 = vector.shape_cast %8 : vector<8xf32> to vector<8x1xf32>
    %cst_3 = arith.constant 1.280000e+02 : f32
    %10 = vector.broadcast %cst_3 : f32 to vector<8x1xf32>
    %11 = arith.divf %9, %10 : vector<8x1xf32>
    %12 = vector.broadcast %4 : vector<8x1xf32> to vector<8x128xf32>
    %13 = arith.subf %0, %12 : vector<8x128xf32>
    %cst_4 = arith.constant 9.99999974E-6 : f32
    %14 = vector.broadcast %cst_4 : f32 to vector<8x1xf32>
    %15 = arith.addf %11, %14 : vector<8x1xf32>
    %16 = math.rsqrt %15 : vector<8x1xf32>
    %17 = vector.broadcast %16 : vector<8x1xf32> to vector<8x128xf32>
    %18 = arith.mulf %13, %17 : vector<8x128xf32>
    %c0_5 = arith.constant 0 : index
    %c0_6 = arith.constant 0 : index
    %19 = vector.load %arg2[%c0_5, %c0_6] : memref<1x128xf32, #tpu.memory_space<vmem>>, vector<1x128xf32>
    %20 = vector.broadcast %19 : vector<1x128xf32> to vector<8x128xf32>
    %21 = arith.mulf %18, %20 : vector<8x128xf32>
    %c0_7 = arith.constant 0 : index
    %c0_8 = arith.constant 0 : index
    %22 = vector.load %arg3[%c0_7, %c0_8] : memref<1x128xf32, #tpu.memory_space<vmem>>, vector<1x128xf32>
    %23 = vector.broadcast %22 : vector<1x128xf32> to vector<8x128xf32>
    %24 = arith.addf %21, %23 : vector<8x128xf32>
    %25 = arith.truncf %24 : vector<8x128xf32> to vector<8x128xbf16>
    %c0_9 = arith.constant 0 : index
    %c0_10 = arith.constant 0 : index
    %26 = vector.load %arg4[%c0_9, %c0_10] : memref<128x384xbf16, #tpu.memory_space<vmem>>, vector<128x384xbf16>
    %cst_11 = arith.constant dense<0.000000e+00> : vector<8x384xf32>
    %27 = tpu.matmul %25, %26, %cst_11 {dimension_numbers = #tpu.dot_dimension_numbers<[1], [0], [0], [1], [0, 0, 1, 1], [], []>} : vector<8x128xbf16>, vector<128x384xbf16>, vector<8x384xf32> -> vector<8x384xf32>
    %c0_12 = arith.constant 0 : index
    %c0_13 = arith.constant 0 : index
    %28 = vector.load %arg5[%c0_12, %c0_13] : memref<1x384xf32, #tpu.memory_space<vmem>>, vector<1x384xf32>
    %29 = vector.broadcast %28 : vector<1x384xf32> to vector<8x384xf32>
    %30 = arith.addf %27, %29 : vector<8x384xf32>
    %c0_14 = arith.constant 0 : index
    %c0_15 = arith.constant 0 : index
    %31 = vector.load %arg6[%c0_14, %c0_15] : memref<128x128xf32, #tpu.memory_space<vmem>>, vector<128x128xf32>
    %32 = vector.extract_strided_slice %30 {offsets = [0, 0], sizes = [8, 128], strides = [1, 1]} : vector<8x384xf32> to vector<8x128xf32>
    %cst_16 = arith.constant dense<0.000000e+00> : vector<8x128xf32>
    %33 = tpu.matmul %32, %31, %cst_16 {dimension_numbers = #tpu.dot_dimension_numbers<[1], [0], [0], [1], [0, 0, 1, 1], [], []>} : vector<8x128xf32>, vector<128x128xf32>, vector<8x128xf32> -> vector<8x128xf32>
    %34 = arith.subf %32, %33 : vector<8x128xf32>
    %35 = arith.mulf %34, %34 : vector<8x128xf32>
    %cst_17 = arith.constant dense<0.000000e+00> : vector<8x128xf32>
    %36 = tpu.matmul %35, %31, %cst_17 {dimension_numbers = #tpu.dot_dimension_numbers<[1], [0], [0], [1], [0, 0, 1, 1], [], []>} : vector<8x128xf32>, vector<128x128xf32>, vector<8x128xf32> -> vector<8x128xf32>
    %cst_18 = arith.constant 9.99999974E-6 : f32
    %37 = vector.broadcast %cst_18 : f32 to vector<8x128xf32>
    %38 = arith.addf %36, %37 : vector<8x128xf32>
    %39 = math.rsqrt %38 : vector<8x128xf32>
    %40 = arith.mulf %34, %39 : vector<8x128xf32>
    %c0_19 = arith.constant 0 : index
    %c0_20 = arith.constant 0 : index
    %41 = vector.load %arg7[%c0_19, %c0_20] : memref<1x256xf32, #tpu.memory_space<vmem>>, vector<1x128xf32>
    %42 = vector.broadcast %41 : vector<1x128xf32> to vector<8x128xf32>
    %43 = arith.mulf %40, %42 : vector<8x128xf32>
    %c0_21 = arith.constant 0 : index
    %c0_22 = arith.constant 0 : index
    %44 = vector.load %arg8[%c0_21, %c0_22] : memref<1x256xf32, #tpu.memory_space<vmem>>, vector<1x128xf32>
    %45 = vector.broadcast %44 : vector<1x128xf32> to vector<8x128xf32>
    %46 = arith.addf %43, %45 : vector<8x128xf32>
    %47 = arith.truncf %46 : vector<8x128xf32> to vector<8x128xbf16>
    %c0_23 = arith.constant 0 : index
    %c0_24 = arith.constant 0 : index
    %48 = vector.load %arg9[%c0_23, %c0_24] : memref<8x384xbf16, #tpu.memory_space<vmem>>, vector<8x128xbf16>
    tpu.vector_store %arg9[%c0_23, %c0_24], %47 {strides = array<i32>} : memref<8x384xbf16, #tpu.memory_space<vmem>>, vector<8x128xbf16>,
    %49 = vector.extract_strided_slice %30 {offsets = [0, 128], sizes = [8, 128], strides = [1, 1]} : vector<8x384xf32> to vector<8x128xf32>
    %cst_25 = arith.constant dense<0.000000e+00> : vector<8x128xf32>
    %50 = tpu.matmul %49, %31, %cst_25 {dimension_numbers = #tpu.dot_dimension_numbers<[1], [0], [0], [1], [0, 0, 1, 1], [], []>} : vector<8x128xf32>, vector<128x128xf32>, vector<8x128xf32> -> vector<8x128xf32>
    %51 = arith.subf %49, %50 : vector<8x128xf32>
    %52 = arith.mulf %51, %51 : vector<8x128xf32>
    %cst_26 = arith.constant dense<0.000000e+00> : vector<8x128xf32>
    %53 = tpu.matmul %52, %31, %cst_26 {dimension_numbers = #tpu.dot_dimension_numbers<[1], [0], [0], [1], [0, 0, 1, 1], [], []>} : vector<8x128xf32>, vector<128x128xf32>, vector<8x128xf32> -> vector<8x128xf32>
    %cst_27 = arith.constant 9.99999974E-6 : f32
    %54 = vector.broadcast %cst_27 : f32 to vector<8x128xf32>
    %55 = arith.addf %53, %54 : vector<8x128xf32>
    %56 = math.rsqrt %55 : vector<8x128xf32>
    %57 = arith.mulf %51, %56 : vector<8x128xf32>
    %c0_28 = arith.constant 0 : index
    %c128 = arith.constant 128 : index
    %58 = vector.load %arg7[%c0_28, %c128] : memref<1x256xf32, #tpu.memory_space<vmem>>, vector<1x128xf32>
    %59 = vector.broadcast %58 : vector<1x128xf32> to vector<8x128xf32>
    %60 = arith.mulf %57, %59 : vector<8x128xf32>
    %c0_29 = arith.constant 0 : index
    %c128_30 = arith.constant 128 : index
    %61 = vector.load %arg8[%c0_29, %c128_30] : memref<1x256xf32, #tpu.memory_space<vmem>>, vector<1x128xf32>
    %62 = vector.broadcast %61 : vector<1x128xf32> to vector<8x128xf32>
    %63 = arith.addf %60, %62 : vector<8x128xf32>
    %64 = arith.truncf %63 : vector<8x128xf32> to vector<8x128xbf16>
    %c0_31 = arith.constant 0 : index
    %c128_32 = arith.constant 128 : index
    %65 = vector.load %arg9[%c0_31, %c128_32] : memref<8x384xbf16, #tpu.memory_space<vmem>>, vector<8x128xbf16>
    tpu.vector_store %arg9[%c0_31, %c128_32], %64 {strides = array<i32>} : memref<8x384xbf16, #tpu.memory_space<vmem>>, vector<8x128xbf16>,
    %66 = vector.extract_strided_slice %30 {offsets = [0, 256], sizes = [8, 128], strides = [1, 1]} : vector<8x384xf32> to vector<8x128xf32>
    %67 = arith.truncf %66 : vector<8x128xf32> to vector<8x128xbf16>
    %c0_33 = arith.constant 0 : index
    %c256 = arith.constant 256 : index
    %68 = vector.load %arg9[%c0_33, %c256] : memref<8x384xbf16, #tpu.memory_space<vmem>>, vector<8x128xbf16>
    tpu.vector_store %arg9[%c0_33, %c256], %67 {strides = array<i32>} : memref<8x384xbf16, #tpu.memory_space<vmem>>, vector<8x128xbf16>,
    return
  }
  func.func @transform_0(%arg0: i32) -> (i32, i32) {
    %c0_i32 = arith.constant 0 : i32
    %c0_i32_0 = arith.constant 0 : i32
    return %arg0, %c0_i32 : i32, i32
  }
  func.func @transform_1(%arg0: i32) -> (i32, i32) {
    %c0_i32 = arith.constant 0 : i32
    %c0_i32_0 = arith.constant 0 : i32
    %c0_i32_1 = arith.constant 0 : i32
    return %c0_i32, %c0_i32_0 : i32, i32
  }
  func.func @transform_2(%arg0: i32) -> (i32, i32) {
    %c0_i32 = arith.constant 0 : i32
    %c0_i32_0 = arith.constant 0 : i32
    %c0_i32_1 = arith.constant 0 : i32
    return %c0_i32, %c0_i32_0 : i32, i32
  }
  func.func @transform_3(%arg0: i32) -> (i32, i32) {
    %c0_i32 = arith.constant 0 : i32
    %c0_i32_0 = arith.constant 0 : i32
    %c0_i32_1 = arith.constant 0 : i32
    return %c0_i32, %c0_i32_0 : i32, i32
  }
  func.func @transform_4(%arg0: i32) -> (i32, i32) {
    %c0_i32 = arith.constant 0 : i32
    %c0_i32_0 = arith.constant 0 : i32
    %c0_i32_1 = arith.constant 0 : i32
    return %c0_i32, %c0_i32_0 : i32, i32
  }
  func.func @transform_5(%arg0: i32) -> (i32, i32) {
    %c0_i32 = arith.constant 0 : i32
    %c0_i32_0 = arith.constant 0 : i32
    %c0_i32_1 = arith.constant 0 : i32
    return %c0_i32, %c0_i32_0 : i32, i32
  }
  func.func @transform_6(%arg0: i32) -> (i32, i32) {
    %c0_i32 = arith.constant 0 : i32
    %c0_i32_0 = arith.constant 0 : i32
    %c0_i32_1 = arith.constant 0 : i32
    return %c0_i32, %c0_i32_0 : i32, i32
  }
  func.func @transform_7(%arg0: i32) -> (i32, i32) {
    %c0_i32 = arith.constant 0 : i32
    %c0_i32_0 = arith.constant 0 : i32
    %c0_i32_1 = arith.constant 0 : i32
    return %c0_i32, %c0_i32_0 : i32, i32
  }
  func.func @transform_8(%arg0: i32) -> (i32, i32) {
    %c0_i32 = arith.constant 0 : i32
    %c0_i32_0 = arith.constant 0 : i32
    return %arg0, %c0_i32 : i32, i32
  }
}

</mosaic_0001>

<llo_original>
// kernel: tpu_custom_call.1
$region0: #{tpu_custom_call.1}
  #allocation0 [shape = 'u32[]', space=smem, size = 0x4, offset = 0x4, fixed_abs, tag = 'smem constant byte address 0x4 - core index']
  #allocation1 [shape = 'u32[144,128]{1,0:T(1,128)}', space=vmem, size = 0x12000, scoped, tag = 'internal scratch']
  %s0 = inlined_call_operand.hbm [shape: f32[8,128], index: 0, kind: input, shape index: {}]
  %s1 = inlined_call_operand.hbm [shape: f32[8,128], index: 1, kind: input, shape index: {}]
  %s2 = inlined_call_operand.hbm [shape: f32[8,128], index: 2, kind: output, shape index: {}]
  %s3 = sld [smem:[#allocation0]]
  $region49: #{tpu_custom_call.1} parent=0
    _
  %s5 = ssub.s32 1, %s3
  %s6 = scalar_select 0, %s5, %s3
  $region1: #{tpu_custom_call.1} parent=0
    #allocation2 [shape = 'u8[4096]{0}', space=vmem, size = 0x1000, scoped, tag = 'input window, operand 0, single buffered']
    #allocation3 [shape = 's32[2]{0}', space=sflag, size = 0x8, scoped, tag = 'scoped memory for tpu_custom_call.1']
    #allocation4 [shape = 's32[2]{0}', space=sflag, size = 0x8, scoped, tag = 'scoped memory for tpu_custom_call.1']
    #allocation5 [shape = 'u8[4096]{0}', space=vmem, size = 0x1000, scoped, tag = 'input window, operand 1, single buffered']
    #allocation6 [shape = 's32[1]{0}', space=sflag, size = 0x4, scoped, tag = 'scoped memory for tpu_custom_call.1']
    #allocation7 [shape = 'u8[4096]{0}', space=vmem, size = 0x1000, scoped, tag = 'output window, operand 0, single buffered']
    %7 = vsyncpa [#allocation3], 0
    %8 = vsyncpa [#allocation6], 0
    %9 = vsyncpa [#allocation4], 0
    loop: start=0, step=1, limit=4
    $region2: #{tpu_custom_call.1} parent=1 // loop_pre_header
      _
    $region3: #{tpu_custom_call.1} parent=1 // loop_header
      %s11 = sphi 0, %s15
      %p12 = scmp.ge.s32.totalorder %s11, 4
      %s19 = sphi 0, %s19
      %s21 = sphi 0, %s19
      %s22 = sphi 0, %s21
      %s36 = sphi 0, %s22
      %s40 = sphi 0, %s40
      %s42 = sphi 0, %s40
      %s43 = sphi 0, %s42
      %s57 = sphi 0, %s43
      %s61 = sphi 0, %s61
      %s63 = sphi 0, %s61
      %s64 = sphi 0, %s63
      %s78 = sphi 0, %s64
    $region4: #{tpu_custom_call.1} parent=1 // loop_header_branch
      %14 = sbr.rel (%p12) target = $region8
    $region5: #{tpu_custom_call.1} parent=1 // loop_body
      %s16 = ssub.s32 %s11, 1
      %s17 = ssub.s32 %s11, 2
      %s18 = sadd.s32 %s11, 1
      %s20 = sadd.s32 %s19, 1
      %p23 = scmp.eq.s32.totalorder %s11, 1
      %p24 = scmp.ne.s32.totalorder %s19, %s21
      %p25 = scmp.eq.s32.totalorder %s11, 0
      %p26 = por %p24, %p25
      %p27 = scmp.ne.s32.totalorder %s19, %s21
      %p28 = scmp.eq.s32.totalorder %s16, 1
      %p29 = por %p27, %p28
      %p30 = scmp.ne.s32.totalorder %s21, %s22
      %p31 = scmp.eq.s32.totalorder %s16, 0
      %p32 = por %p30, %p31
      %p33 = scmp.ne.s32.totalorder %s21, %s22
      %p34 = scmp.eq.s32.totalorder %s17, 1
      %p35 = por %p33, %p34
      %p37 = scmp.ne.s32.totalorder %s22, %s36
      %p38 = scmp.eq.s32.totalorder %s17, 0
      %p39 = por %p37, %p38
      %s41 = sadd.s32 %s40, 1
      %p44 = scmp.eq.s32.totalorder %s11, 1
      %p45 = scmp.ne.s32.totalorder %s40, %s42
      %p46 = scmp.eq.s32.totalorder %s11, 0
      %p47 = por %p45, %p46
      %p48 = scmp.ne.s32.totalorder %s40, %s42
      %p49 = scmp.eq.s32.totalorder %s16, 1
      %p50 = por %p48, %p49
      %p51 = scmp.ne.s32.totalorder %s42, %s43
      %p52 = scmp.eq.s32.totalorder %s16, 0
      %p53 = por %p51, %p52
      %p54 = scmp.ne.s32.totalorder %s42, %s43
      %p55 = scmp.eq.s32.totalorder %s17, 1
      %p56 = por %p54, %p55
      %p58 = scmp.ne.s32.totalorder %s43, %s57
      %p59 = scmp.eq.s32.totalorder %s17, 0
      %p60 = por %p58, %p59
      %s62 = sadd.s32 %s61, 1
      %p65 = scmp.eq.s32.totalorder %s11, 1
      %p66 = scmp.ne.s32.totalorder %s61, %s63
      %p67 = scmp.eq.s32.totalorder %s11, 0
      %p68 = por %p66, %p67
      %p69 = scmp.ne.s32.totalorder %s61, %s63
      %p70 = scmp.eq.s32.totalorder %s16, 1
      %p71 = por %p69, %p70
      %p72 = scmp.ne.s32.totalorder %s63, %s64
      %p73 = scmp.eq.s32.totalorder %s16, 0
      %p74 = por %p72, %p73
      %p75 = scmp.ne.s32.totalorder %s63, %s64
      %p76 = scmp.eq.s32.totalorder %s17, 1
      %p77 = por %p75, %p76
      %p79 = scmp.ne.s32.totalorder %s64, %s78
      %p80 = scmp.eq.s32.totalorder %s17, 0
      %p81 = por %p79, %p80
      %p82 = scmp.le.s32.totalorder 1, %s11
      %p83 = scmp.lt.s32.totalorder %s11, 3
      %p84 = pnand %p82, %p83
      %p85 = pneg %p84
      // Predicated region
      $region9: #{tpu_custom_call.1} parent=5 // pred_check
        _
      $region10: #{tpu_custom_call.1} parent=5 // pred_check_branch
        %87 = sbr.rel (%p84) target = $region12
      $region11: #{tpu_custom_call.1} parent=5 // pred_region
        %s88 = ssub.s32 %s11, 1
        // Predicated region
        $region13: #{tpu_custom_call.1} parent=11 // pred_check
          %p89 = pneg %p32
        $region14: #{tpu_custom_call.1} parent=11 // pred_check_branch
          %91 = sbr.rel (%p89) target = $region16
        $region15: #{tpu_custom_call.1} parent=11 // pred_region
          %s93 = ssub.s32 128, 128
          %94 = vsyncadd [#allocation3], %s93
          %s96 = sshll.u32 [#allocation2], 4
          %s97 = int_to_ptr.vmem [resolvable:$true] %s96
          %99 = dma.hbm_to_vmem [thread:$0]  %s0, 128, %s97, [#allocation3]
        $region16: #{tpu_custom_call.1} parent=11 // pred_fallthru
          _
        // Predicated region
        $region17: #{tpu_custom_call.1} parent=11 // pred_check
          %p100 = pneg %p53
        $region18: #{tpu_custom_call.1} parent=11 // pred_check_branch
          %102 = sbr.rel (%p100) target = $region20
        $region19: #{tpu_custom_call.1} parent=11 // pred_region
          %s104 = ssub.s32 128, 128
          %105 = vsyncadd [#allocation6], %s104
          %s107 = sshll.u32 [#allocation5], 4
          %s108 = int_to_ptr.vmem [resolvable:$true] %s107
          %110 = dma.hbm_to_vmem [thread:$0]  %s1, 128, %s108, [#allocation6]
        $region20: #{tpu_custom_call.1} parent=11 // pred_fallthru
          _
      $region12: #{tpu_custom_call.1} parent=5 // pred_fallthru
        _
      %p111 = scmp.lt.s32.totalorder %s11, 2
      // Predicated region
      $region21: #{tpu_custom_call.1} parent=5 // pred_check
        %p112 = pneg %p111
      $region22: #{tpu_custom_call.1} parent=5 // pred_check_branch
        %114 = sbr.rel (%p112) target = $region24
      $region23: #{tpu_custom_call.1} parent=5 // pred_region
        _
      $region24: #{tpu_custom_call.1} parent=5 // pred_fallthru
        _
      %p115 = scmp.le.s32.totalorder 1, %s11
      %p116 = scmp.lt.s32.totalorder %s11, 3
      %p117 = pnand %p115, %p116
      %p118 = pneg %p117
      // Predicated region
      $region25: #{tpu_custom_call.1} parent=5 // pred_check
        _
      $region26: #{tpu_custom_call.1} parent=5 // pred_check_branch
        %120 = sbr.rel (%p117) target = $region28
      $region27: #{tpu_custom_call.1} parent=5 // pred_region
        %s121 = ssub.s32 %s11, 1
        // Predicated region
        $region29: #{tpu_custom_call.1} parent=27 // pred_check
          %p122 = pneg %p32
        $region30: #{tpu_custom_call.1} parent=27 // pred_check_branch
          %124 = sbr.rel (%p122) target = $region32
        $region31: #{tpu_custom_call.1} parent=27 // pred_region
          %125 = dma.done [#allocation3], 128
        $region32: #{tpu_custom_call.1} parent=27 // pred_fallthru
          _
        // Predicated region
        $region33: #{tpu_custom_call.1} parent=27 // pred_check
          %p126 = pneg %p53
        $region34: #{tpu_custom_call.1} parent=27 // pred_check_branch
          %128 = sbr.rel (%p126) target = $region36
        $region35: #{tpu_custom_call.1} parent=27 // pred_region
          %129 = dma.done [#allocation6], 128
        $region36: #{tpu_custom_call.1} parent=27 // pred_fallthru
          _
        %p130 = pneg %p32
        %p131 = pneg %p29
        %p132 = pneg %p53
        %p133 = pneg %p50
        %p134 = pneg %p74
        %p135 = pneg %p71
        %v136 = vld [vmem:[#allocation2] sm:$0xff]
        %v137 = vld [vmem:[#allocation5] sm:$0xff]
        %v138 = vadd.f32 %v136, %v137
        %139 = vst [vmem:[#allocation7] sm:$0xff] %v138
        // Predicated region
        $region37: #{tpu_custom_call.1} parent=27 // pred_check
          %p140 = pneg %p71
        $region38: #{tpu_custom_call.1} parent=27 // pred_check_branch
          %142 = sbr.rel (%p140) target = $region40
        $region39: #{tpu_custom_call.1} parent=27 // pred_region
          %s144 = ssub.s32 128, 128
          %145 = vsyncadd [#allocation4], %s144
          %s147 = sshll.u32 [#allocation7], 4
          %s148 = int_to_ptr.vmem [resolvable:$true] %s147
          %150 = dma.vmem_to_hbm [thread:$0]  %s148, 128, %s2, [#allocation4]
        $region40: #{tpu_custom_call.1} parent=27 // pred_fallthru
          _
        // Predicated region
        $region41: #{tpu_custom_call.1} parent=27 // pred_check
          %p151 = pneg %p71
        $region42: #{tpu_custom_call.1} parent=27 // pred_check_branch
          %153 = sbr.rel (%p151) target = $region44
        $region43: #{tpu_custom_call.1} parent=27 // pred_region
          %154 = dma.done [#allocation4], 128
        $region44: #{tpu_custom_call.1} parent=27 // pred_fallthru
          _
      $region28: #{tpu_custom_call.1} parent=5 // pred_fallthru
        _
      %p155 = scmp.le.s32.totalorder 2, %s11
      // Predicated region
      $region45: #{tpu_custom_call.1} parent=5 // pred_check
        %p156 = pneg %p155
      $region46: #{tpu_custom_call.1} parent=5 // pred_check_branch
        %158 = sbr.rel (%p156) target = $region48
      $region47: #{tpu_custom_call.1} parent=5 // pred_region
        %s159 = ssub.s32 %s11, 2
      $region48: #{tpu_custom_call.1} parent=5 // pred_fallthru
        _
    $region6: #{tpu_custom_call.1} parent=1 // loop_footer
      %s15 = sadd.s32 1, %s11
    $region7: #{tpu_custom_call.1} parent=1 // loop_footer_branch
      %10 = sbr.rel target = $region3
    $region8: #{tpu_custom_call.1} parent=1 // loop_exit
      _
    %160 = vsyncpa [#allocation3], 1
    %s161 = scalar_lea.sflag [#allocation3], 1
    %162 = vsyncpa %s161, 1
    %163 = vsyncpa [#allocation6], 1
    %164 = vsyncpa [#allocation4], 1
    %s165 = scalar_lea.sflag [#allocation4], 1
    %166 = vsyncpa %s165, 1

// kernel: tpu_custom_call.1
$region0: #{tpu_custom_call.1}
  #allocation0 [shape = 'u32[]', space=smem, size = 0x4, offset = 0x4, fixed_abs, tag = 'smem constant byte address 0x4 - core index']
  #allocation1 [shape = 'u32[144,128]{1,0:T(1,128)}', space=vmem, size = 0x12000, scoped, tag = 'internal scratch']
  %s0 = inlined_call_operand.hbm [shape: f32[16,128], index: 0, kind: input, shape index: {}]
  %s1 = inlined_call_operand.hbm [shape: f32[1,128], index: 1, kind: input, shape index: {}]
  %s2 = inlined_call_operand.hbm [shape: f32[1,128], index: 2, kind: input, shape index: {}]
  %s3 = inlined_call_operand.hbm [shape: bf16[128,384], index: 3, kind: input, shape index: {}]
  %s4 = inlined_call_operand.vmem [shape: f32[1,384], index: 4, kind: input, shape index: {}]
  %s5 = inlined_call_operand.hbm [shape: f32[128,128], index: 5, kind: input, shape index: {}]
  %s6 = inlined_call_operand.vmem [shape: f32[1,256], index: 6, kind: input, shape index: {}]
  %s7 = inlined_call_operand.vmem [shape: f32[1,256], index: 7, kind: input, shape index: {}]
  %s8 = inlined_call_operand.hbm [shape: bf16[16,384], index: 8, kind: output, shape index: {}]
  %s9 = sld [smem:[#allocation0]]
  $region85: #{tpu_custom_call.1} parent=0
    _
  %s11 = ssub.s32 1, %s9
  %s12 = scalar_select 0, %s11, %s9
  $region1: #{tpu_custom_call.1} parent=0
    #allocation2 [shape = 'u8[8192]{0}', space=vmem, size = 0x2000, scoped, tag = 'input window, operand 0']
    #allocation3 [shape = 's32[2]{0}', space=sflag, size = 0x8, scoped, tag = 'scoped memory for tpu_custom_call.1']
    #allocation4 [shape = 's32[2]{0}', space=sflag, size = 0x8, scoped, tag = 'scoped memory for tpu_custom_call.1']
    #allocation5 [shape = 'u8[512]{0}', space=vmem, size = 0x400, scoped, tag = 'input window, operand 1, single buffered']
    #allocation6 [shape = 's32[1]{0}', space=sflag, size = 0x4, scoped, tag = 'scoped memory for tpu_custom_call.1']
    #allocation7 [shape = 'u8[512]{0}', space=vmem, size = 0x400, scoped, tag = 'input window, operand 2, single buffered']
    #allocation8 [shape = 'u8[98304]{0}', space=vmem, size = 0x18000, scoped, tag = 'input window, operand 3, single buffered']
    #allocation9 [shape = 's32[1]{0}', space=sflag, size = 0x4, scoped, tag = 'scoped memory for tpu_custom_call.1']
    #allocation10 [shape = 'u8[65536]{0}', space=vmem, size = 0x10000, scoped, tag = 'input window, operand 5, single buffered']
    #allocation11 [shape = 'u8[12288]{0}', space=vmem, size = 0x3000, scoped, tag = 'output window, operand 0']
    %13 = vsyncpa [#allocation3], 0
    %s14 = scalar_lea.sflag [#allocation3], 1
    %15 = vsyncpa %s14, 0
    %16 = vsyncpa [#allocation6], 0
    %17 = vsyncpa [#allocation9], 0
    %18 = vsyncpa [#allocation4], 0
    %s19 = scalar_lea.sflag [#allocation4], 1
    %20 = vsyncpa %s19, 0
    loop: start=0, step=1, limit=4
    $region2: #{tpu_custom_call.1} parent=1 // loop_pre_header
      _
    $region3: #{tpu_custom_call.1} parent=1 // loop_header
      %s22 = sphi 0, %s26
      %p23 = scmp.ge.s32.totalorder %s22, 4
      %s32 = sphi 0, %s34
      %s35 = sphi 0, %s32
      %s36 = sphi 0, %s35
      %s52 = sphi 0, %s36
      %s56 = sphi 0, %s56
      %s58 = sphi 0, %s56
      %s59 = sphi 0, %s58
      %s73 = sphi 0, %s59
      %s77 = sphi 0, %s77
      %s79 = sphi 0, %s77
      %s80 = sphi 0, %s79
      %s94 = sphi 0, %s80
      %s98 = sphi 0, %s98
      %s100 = sphi 0, %s98
      %s101 = sphi 0, %s100
      %s115 = sphi 0, %s101
      %s119 = sphi 0, %s119
      %s121 = sphi 0, %s119
      %s122 = sphi 0, %s121
      %s136 = sphi 0, %s122
      %s140 = sphi 0, %s140
      %s142 = sphi 0, %s140
      %s143 = sphi 0, %s142
      %s157 = sphi 0, %s143
      %s161 = sphi 0, %s161
      %s163 = sphi 0, %s161
      %s164 = sphi 0, %s163
      %s178 = sphi 0, %s164
      %s182 = sphi 0, %s182
      %s184 = sphi 0, %s182
      %s185 = sphi 0, %s184
      %s199 = sphi 0, %s185
      %s205 = sphi 0, %s207
      %s208 = sphi 0, %s205
      %s209 = sphi 0, %s208
      %s225 = sphi 0, %s209
    $region4: #{tpu_custom_call.1} parent=1 // loop_header_branch
      %25 = sbr.rel (%p23) target = $region8
    $region5: #{tpu_custom_call.1} parent=1 // loop_body
      %s27 = ssub.s32 %s22, 1
      %s28 = ssub.s32 %s22, 2
      %s29 = sadd.s32 %s22, 1
      %s30 = ssub.s32 %s22, %s29
      %p31 = scmp.eq.s32.totalorder %s30, 0
      %s33 = sadd.s32 %s32, 1
      %s34 = scalar_select %p31, %s32, %s33
      %p37 = pneg %p31
      %p38 = scmp.eq.s32.totalorder %s22, 1
      %p39 = por %p37, %p38
      %p40 = scmp.ne.s32.totalorder %s32, %s35
      %p41 = scmp.eq.s32.totalorder %s22, 0
      %p42 = por %p40, %p41
      %p43 = scmp.ne.s32.totalorder %s32, %s35
      %p44 = scmp.eq.s32.totalorder %s27, 1
      %p45 = por %p43, %p44
      %p46 = scmp.ne.s32.totalorder %s35, %s36
      %p47 = scmp.eq.s32.totalorder %s27, 0
      %p48 = por %p46, %p47
      %p49 = scmp.ne.s32.totalorder %s35, %s36
      %p50 = scmp.eq.s32.totalorder %s28, 1
      %p51 = por %p49, %p50
      %p53 = scmp.ne.s32.totalorder %s36, %s52
      %p54 = scmp.eq.s32.totalorder %s28, 0
      %p55 = por %p53, %p54
      %s57 = sadd.s32 %s56, 1
      %p60 = scmp.eq.s32.totalorder %s22, 1
      %p61 = scmp.ne.s32.totalorder %s56, %s58
      %p62 = scmp.eq.s32.totalorder %s22, 0
      %p63 = por %p61, %p62
      %p64 = scmp.ne.s32.totalorder %s56, %s58
      %p65 = scmp.eq.s32.totalorder %s27, 1
      %p66 = por %p64, %p65
      %p67 = scmp.ne.s32.totalorder %s58, %s59
      %p68 = scmp.eq.s32.totalorder %s27, 0
      %p69 = por %p67, %p68
      %p70 = scmp.ne.s32.totalorder %s58, %s59
      %p71 = scmp.eq.s32.totalorder %s28, 1
      %p72 = por %p70, %p71
      %p74 = scmp.ne.s32.totalorder %s59, %s73
      %p75 = scmp.eq.s32.totalorder %s28, 0
      %p76 = por %p74, %p75
      %s78 = sadd.s32 %s77, 1
      %p81 = scmp.eq.s32.totalorder %s22, 1
      %p82 = scmp.ne.s32.totalorder %s77, %s79
      %p83 = scmp.eq.s32.totalorder %s22, 0
      %p84 = por %p82, %p83
      %p85 = scmp.ne.s32.totalorder %s77, %s79
      %p86 = scmp.eq.s32.totalorder %s27, 1
      %p87 = por %p85, %p86
      %p88 = scmp.ne.s32.totalorder %s79, %s80
      %p89 = scmp.eq.s32.totalorder %s27, 0
      %p90 = por %p88, %p89
      %p91 = scmp.ne.s32.totalorder %s79, %s80
      %p92 = scmp.eq.s32.totalorder %s28, 1
      %p93 = por %p91, %p92
      %p95 = scmp.ne.s32.totalorder %s80, %s94
      %p96 = scmp.eq.s32.totalorder %s28, 0
      %p97 = por %p95, %p96
      %s99 = sadd.s32 %s98, 1
      %p102 = scmp.eq.s32.totalorder %s22, 1
      %p103 = scmp.ne.s32.totalorder %s98, %s100
      %p104 = scmp.eq.s32.totalorder %s22, 0
      %p105 = por %p103, %p104
      %p106 = scmp.ne.s32.totalorder %s98, %s100
      %p107 = scmp.eq.s32.totalorder %s27, 1
      %p108 = por %p106, %p107
      %p109 = scmp.ne.s32.totalorder %s100, %s101
      %p110 = scmp.eq.s32.totalorder %s27, 0
      %p111 = por %p109, %p110
      %p112 = scmp.ne.s32.totalorder %s100, %s101
      %p113 = scmp.eq.s32.totalorder %s28, 1
      %p114 = por %p112, %p113
      %p116 = scmp.ne.s32.totalorder %s101, %s115
      %p117 = scmp.eq.s32.totalorder %s28, 0
      %p118 = por %p116, %p117
      %s120 = sadd.s32 %s119, 1
      %p123 = scmp.eq.s32.totalorder %s22, 1
      %p124 = scmp.ne.s32.totalorder %s119, %s121
      %p125 = scmp.eq.s32.totalorder %s22, 0
      %p126 = por %p124, %p125
      %p127 = scmp.ne.s32.totalorder %s119, %s121
      %p128 = scmp.eq.s32.totalorder %s27, 1
      %p129 = por %p127, %p128
      %p130 = scmp.ne.s32.totalorder %s121, %s122
      %p131 = scmp.eq.s32.totalorder %s27, 0
      %p132 = por %p130, %p131
      %p133 = scmp.ne.s32.totalorder %s121, %s122
      %p134 = scmp.eq.s32.totalorder %s28, 1
      %p135 = por %p133, %p134
      %p137 = scmp.ne.s32.totalorder %s122, %s136
      %p138 = scmp.eq.s32.totalorder %s28, 0
      %p139 = por %p137, %p138
      %s141 = sadd.s32 %s140, 1
      %p144 = scmp.eq.s32.totalorder %s22, 1
      %p145 = scmp.ne.s32.totalorder %s140, %s142
      %p146 = scmp.eq.s32.totalorder %s22, 0
      %p147 = por %p145, %p146
      %p148 = scmp.ne.s32.totalorder %s140, %s142
      %p149 = scmp.eq.s32.totalorder %s27, 1
      %p150 = por %p148, %p149
      %p151 = scmp.ne.s32.totalorder %s142, %s143
      %p152 = scmp.eq.s32.totalorder %s27, 0
      %p153 = por %p151, %p152
      %p154 = scmp.ne.s32.totalorder %s142, %s143
      %p155 = scmp.eq.s32.totalorder %s28, 1
      %p156 = por %p154, %p155
      %p158 = scmp.ne.s32.totalorder %s143, %s157
      %p159 = scmp.eq.s32.totalorder %s28, 0
      %p160 = por %p158, %p159
      %s162 = sadd.s32 %s161, 1
      %p165 = scmp.eq.s32.totalorder %s22, 1
      %p166 = scmp.ne.s32.totalorder %s161, %s163
      %p167 = scmp.eq.s32.totalorder %s22, 0
      %p168 = por %p166, %p167
      %p169 = scmp.ne.s32.totalorder %s161, %s163
      %p170 = scmp.eq.s32.totalorder %s27, 1
      %p171 = por %p169, %p170
      %p172 = scmp.ne.s32.totalorder %s163, %s164
      %p173 = scmp.eq.s32.totalorder %s27, 0
      %p174 = por %p172, %p173
      %p175 = scmp.ne.s32.totalorder %s163, %s164
      %p176 = scmp.eq.s32.totalorder %s28, 1
      %p177 = por %p175, %p176
      %p179 = scmp.ne.s32.totalorder %s164, %s178
      %p180 = scmp.eq.s32.totalorder %s28, 0
      %p181 = por %p179, %p180
      %s183 = sadd.s32 %s182, 1
      %p186 = scmp.eq.s32.totalorder %s22, 1
      %p187 = scmp.ne.s32.totalorder %s182, %s184
      %p188 = scmp.eq.s32.totalorder %s22, 0
      %p189 = por %p187, %p188
      %p190 = scmp.ne.s32.totalorder %s182, %s184
      %p191 = scmp.eq.s32.totalorder %s27, 1
      %p192 = por %p190, %p191
      %p193 = scmp.ne.s32.totalorder %s184, %s185
      %p194 = scmp.eq.s32.totalorder %s27, 0
      %p195 = por %p193, %p194
      %p196 = scmp.ne.s32.totalorder %s184, %s185
      %p197 = scmp.eq.s32.totalorder %s28, 1
      %p198 = por %p196, %p197
      %p200 = scmp.ne.s32.totalorder %s185, %s199
      %p201 = scmp.eq.s32.totalorder %s28, 0
      %p202 = por %p200, %p201
      %s203 = ssub.s32 %s22, %s29
      %p204 = scmp.eq.s32.totalorder %s203, 0
      %s206 = sadd.s32 %s205, 1
      %s207 = scalar_select %p204, %s205, %s206
      %p210 = pneg %p204
      %p211 = scmp.eq.s32.totalorder %s22, 1
      %p212 = por %p210, %p211
      %p213 = scmp.ne.s32.totalorder %s205, %s208
      %p214 = scmp.eq.s32.totalorder %s22, 0
      %p215 = por %p213, %p214
      %p216 = scmp.ne.s32.totalorder %s205, %s208
      %p217 = scmp.eq.s32.totalorder %s27, 1
      %p218 = por %p216, %p217
      %p219 = scmp.ne.s32.totalorder %s208, %s209
      %p220 = scmp.eq.s32.totalorder %s27, 0
      %p221 = por %p219, %p220
      %p222 = scmp.ne.s32.totalorder %s208, %s209
      %p223 = scmp.eq.s32.totalorder %s28, 1
      %p224 = por %p222, %p223
      %p226 = scmp.ne.s32.totalorder %s209, %s225
      %p227 = scmp.eq.s32.totalorder %s28, 0
      %p228 = por %p226, %p227
      %p229 = scmp.le.s32.totalorder 1, %s22
      %p230 = scmp.lt.s32.totalorder %s22, 3
      %p231 = pnand %p229, %p230
      %p232 = pneg %p231
      // Predicated region
      $region9: #{tpu_custom_call.1} parent=5 // pred_check
        _
      $region10: #{tpu_custom_call.1} parent=5 // pred_check_branch
        %234 = sbr.rel (%p231) target = $region12
      $region11: #{tpu_custom_call.1} parent=5 // pred_region
        %s235 = ssub.s32 %s22, 1
        // Predicated region
        $region13: #{tpu_custom_call.1} parent=11 // pred_check
          %p236 = pneg %p69
        $region14: #{tpu_custom_call.1} parent=11 // pred_check_branch
          %238 = sbr.rel (%p236) target = $region16
        $region15: #{tpu_custom_call.1} parent=11 // pred_region
          %s240 = ssub.s32 16, 16
          %241 = vsyncadd [#allocation6], %s240
          %s243 = sshll.u32 [#allocation5], 4
          %s244 = int_to_ptr.vmem [resolvable:$true] %s243
          %246 = dma.hbm_to_vmem [thread:$0]  %s1, 16, %s244, [#allocation6]
        $region16: #{tpu_custom_call.1} parent=11 // pred_fallthru
          _
        // Predicated region
        $region17: #{tpu_custom_call.1} parent=11 // pred_check
          %p247 = pneg %p90
        $region18: #{tpu_custom_call.1} parent=11 // pred_check_branch
          %249 = sbr.rel (%p247) target = $region20
        $region19: #{tpu_custom_call.1} parent=11 // pred_region
          %s251 = ssub.s32 16, 16
          %252 = vsyncadd [#allocation6], %s251
          %s254 = sshll.u32 [#allocation7], 4
          %s255 = int_to_ptr.vmem [resolvable:$true] %s254
          %257 = dma.hbm_to_vmem [thread:$0]  %s2, 16, %s255, [#allocation6]
        $region20: #{tpu_custom_call.1} parent=11 // pred_fallthru
          _
        // Predicated region
        $region21: #{tpu_custom_call.1} parent=11 // pred_check
          %p258 = pneg %p111
        $region22: #{tpu_custom_call.1} parent=11 // pred_check_branch
          %260 = sbr.rel (%p258) target = $region24
        $region23: #{tpu_custom_call.1} parent=11 // pred_region
          %s262 = ssub.s32 3072, 3072
          %263 = vsyncadd [#allocation9], %s262
          %s264 = sshll.u32 [#allocation8], 4
          %s265 = int_to_ptr.vmem [resolvable:$true] %s264
          %270 = dma.hbm_to_vmem [thread:$0]  %s3, 3072, %s265, [#allocation9], 192, 192, 12
        $region24: #{tpu_custom_call.1} parent=11 // pred_fallthru
          _
        // Predicated region
        $region25: #{tpu_custom_call.1} parent=11 // pred_check
          %p271 = pneg %p132
        $region26: #{tpu_custom_call.1} parent=11 // pred_check_branch
          %273 = sbr.rel (%p271) target = $region28
        $region27: #{tpu_custom_call.1} parent=11 // pred_region
          _
        $region28: #{tpu_custom_call.1} parent=11 // pred_fallthru
          _
        // Predicated region
        $region29: #{tpu_custom_call.1} parent=11 // pred_check
          %p274 = pneg %p153
        $region30: #{tpu_custom_call.1} parent=11 // pred_check_branch
          %276 = sbr.rel (%p274) target = $region32
        $region31: #{tpu_custom_call.1} parent=11 // pred_region
          %s278 = ssub.s32 2048, 2048
          %279 = vsyncadd [#allocation9], %s278
          %s280 = sshll.u32 [#allocation10], 4
          %s281 = int_to_ptr.vmem [resolvable:$true] %s280
          %286 = dma.hbm_to_vmem [thread:$0]  %s5, 2048, %s281, [#allocation9], 128, 128, 8
        $region32: #{tpu_custom_call.1} parent=11 // pred_fallthru
          _
        // Predicated region
        $region33: #{tpu_custom_call.1} parent=11 // pred_check
          %p287 = pneg %p174
        $region34: #{tpu_custom_call.1} parent=11 // pred_check_branch
          %289 = sbr.rel (%p287) target = $region36
        $region35: #{tpu_custom_call.1} parent=11 // pred_region
          _
        $region36: #{tpu_custom_call.1} parent=11 // pred_fallthru
          _
        // Predicated region
        $region37: #{tpu_custom_call.1} parent=11 // pred_check
          %p290 = pneg %p195
        $region38: #{tpu_custom_call.1} parent=11 // pred_check_branch
          %292 = sbr.rel (%p290) target = $region40
        $region39: #{tpu_custom_call.1} parent=11 // pred_region
          _
        $region40: #{tpu_custom_call.1} parent=11 // pred_fallthru
          _
      $region12: #{tpu_custom_call.1} parent=5 // pred_fallthru
        _
      %p293 = scmp.lt.s32.totalorder %s22, 2
      // Predicated region
      $region41: #{tpu_custom_call.1} parent=5 // pred_check
        %p294 = pneg %p293
      $region42: #{tpu_custom_call.1} parent=5 // pred_check_branch
        %296 = sbr.rel (%p294) target = $region44
      $region43: #{tpu_custom_call.1} parent=5 // pred_region
        // Predicated region
        $region45: #{tpu_custom_call.1} parent=43 // pred_check
          %p297 = pneg %p42
        $region46: #{tpu_custom_call.1} parent=43 // pred_check_branch
          %299 = sbr.rel (%p297) target = $region48
        $region47: #{tpu_custom_call.1} parent=43 // pred_region
          %s300 = sand.u32 %s32, 1
          %s301 = scalar_lea.sflag [#allocation3], %s300
          %s302 = sand.u32 %s32, 1
          %s303 = smul.addr %s302, 8
          %s304 = scalar_lea.vmem [#allocation2], %s303
          %s306 = ssub.s32 128, 128
          %307 = vsyncadd %s301, %s306
          %s308 = smul.addr %s22, 128
          %s309 = scalar_lea.hbm %s0, %s308
          %s311 = sshll.u32 %s304, 4
          %s312 = int_to_ptr.vmem [resolvable:$true] %s311
          %314 = dma.hbm_to_vmem [thread:$0]  %s309, 128, %s312, %s301
        $region48: #{tpu_custom_call.1} parent=43 // pred_fallthru
          _
      $region44: #{tpu_custom_call.1} parent=5 // pred_fallthru
        _
      %p315 = scmp.le.s32.totalorder 1, %s22
      %p316 = scmp.lt.s32.totalorder %s22, 3
      %p317 = pnand %p315, %p316
      %p318 = pneg %p317
      // Predicated region
      $region49: #{tpu_custom_call.1} parent=5 // pred_check
        _
      $region50: #{tpu_custom_call.1} parent=5 // pred_check_branch
        %320 = sbr.rel (%p317) target = $region52
      $region51: #{tpu_custom_call.1} parent=5 // pred_region
        %s321 = ssub.s32 %s22, 1
        %s322 = sand.u32 %s35, 1
        %s323 = scalar_lea.sflag [#allocation3], %s322
        %s324 = sand.u32 %s35, 1
        %s325 = smul.addr %s324, 8
        %s326 = scalar_lea.vmem [#allocation2], %s325
        // Predicated region
        $region53: #{tpu_custom_call.1} parent=51 // pred_check
          %p327 = pneg %p48
        $region54: #{tpu_custom_call.1} parent=51 // pred_check_branch
          %329 = sbr.rel (%p327) target = $region56
        $region55: #{tpu_custom_call.1} parent=51 // pred_region
          %330 = dma.done %s323, 128
        $region56: #{tpu_custom_call.1} parent=51 // pred_fallthru
          _
        // Predicated region
        $region57: #{tpu_custom_call.1} parent=51 // pred_check
          %p331 = pneg %p69
        $region58: #{tpu_custom_call.1} parent=51 // pred_check_branch
          %333 = sbr.rel (%p331) target = $region60
        $region59: #{tpu_custom_call.1} parent=51 // pred_region
          %334 = dma.done [#allocation6], 16
        $region60: #{tpu_custom_call.1} parent=51 // pred_fallthru
          _
        // Predicated region
        $region61: #{tpu_custom_call.1} parent=51 // pred_check
          %p335 = pneg %p90
        $region62: #{tpu_custom_call.1} parent=51 // pred_check_branch
          %337 = sbr.rel (%p335) target = $region64
        $region63: #{tpu_custom_call.1} parent=51 // pred_region
          %338 = dma.done [#allocation6], 16
        $region64: #{tpu_custom_call.1} parent=51 // pred_fallthru
          _
        // Predicated region
        $region65: #{tpu_custom_call.1} parent=51 // pred_check
          %p339 = pneg %p111
        $region66: #{tpu_custom_call.1} parent=51 // pred_check_branch
          %341 = sbr.rel (%p339) target = $region68
        $region67: #{tpu_custom_call.1} parent=51 // pred_region
          %342 = dma.done [#allocation9], 3072
        $region68: #{tpu_custom_call.1} parent=51 // pred_fallthru
          _
        // Predicated region
        $region69: #{tpu_custom_call.1} parent=51 // pred_check
          %p343 = pneg %p153
        $region70: #{tpu_custom_call.1} parent=51 // pred_check_branch
          %345 = sbr.rel (%p343) target = $region72
        $region71: #{tpu_custom_call.1} parent=51 // pred_region
          %346 = dma.done [#allocation9], 2048
        $region72: #{tpu_custom_call.1} parent=51 // pred_fallthru
          _
        %s347 = sand.u32 %s35, 1
        %s348 = scalar_lea.sflag [#allocation3], %s347
        %s349 = sand.u32 %s35, 1
        %s350 = smul.addr %s349, 8
        %s351 = scalar_lea.vmem [#allocation2], %s350
        %p352 = pneg %p48
        %p353 = pneg %p45
        %p354 = pneg %p69
        %p355 = pneg %p66
        %p356 = pneg %p90
        %p357 = pneg %p87
        %p358 = pneg %p111
        %p359 = pneg %p108
        %p360 = pneg %p132
        %p361 = pneg %p129
        %p362 = pneg %p153
        %p363 = pneg %p150
        %p364 = pneg %p174
        %p365 = pneg %p171
        %p366 = pneg %p195
        %p367 = pneg %p192
        %p368 = pneg %p221
        %p369 = pneg %p218
        %s370 = sand.u32 %s208, 1
        %s371 = scalar_lea.sflag [#allocation4], %s370
        %s372 = sand.u32 %s208, 1
        %s373 = smul.addr %s372, 12
        %s374 = scalar_lea.vmem [#allocation11], %s373
        %v376 = vld [vmem:[%s326] sm:$0xff]
        %377 = vadd.xlane.f32.xlu0 %v376
        %v378 = vpop.xlane.xlu0 %377
        %v379 = vrcp.pop 128.0
        %v380 = vmul.f32 %v378, %v379
        %v381 = vsub.f32 %v376, %v380
        %v382 = vmul.f32 %v381, %v381
        %383 = vadd.xlane.f32.xlu0 %v382
        %v384 = vpop.xlane.xlu0 %383
        %v385 = vmul.f32 %v384, %v379
        %v386 = vadd.f32 %v385, 1e-05
        %v387 = vrsqrt.pop %v386
        %v388 = vmul.f32 %v381, %v387
        %v389 = vld [vmem:[#allocation5] sm:$0x1]
        %v391 = vlaneseq
        %v392 = vshrl.u32 %v391, 7
        %v393 = vsub.s32 0, %v392
        %v394 = vrot.slane %v389, %v393
        %v396 = vmul.f32 %v388, %v394
        %v397 = vld [vmem:[#allocation7] sm:$0x1]
        %v399 = vlaneseq
        %v400 = vshrl.u32 %v399, 7
        %v401 = vsub.s32 0, %v400
        %v402 = vrot.slane %v397, %v401
        %v404 = vadd.f32 %v396, %v402
        %v405 = vpack.c.bf16 %v404, %v404
        %v406 = vld [vmem:[#allocation8] sm:$0xff]
        %v407 = vld [vmem:[#allocation8 + $0x8] sm:$0xf]
        %v408 = vld [vmem:[#allocation8 + $0xc] sm:$0xff]
        %v409 = vld [vmem:[#allocation8 + $0x14] sm:$0xf]
        %v410 = vld [vmem:[#allocation8 + $0x18] sm:$0xff]
        %v411 = vld [vmem:[#allocation8 + $0x20] sm:$0xf]
        %v412 = vld [vmem:[#allocation8 + $0x24] sm:$0xff]
        %v413 = vld [vmem:[#allocation8 + $0x2c] sm:$0xf]
        %v414 = vld [vmem:[#allocation8 + $0x30] sm:$0xff]
        %v415 = vld [vmem:[#allocation8 + $0x38] sm:$0xf]
        %v416 = vld [vmem:[#allocation8 + $0x3c] sm:$0xff]
        %v417 = vld [vmem:[#allocation8 + $0x44] sm:$0xf]
        %v418 = vld [vmem:[#allocation8 + $0x48] sm:$0xff]
        %v419 = vld [vmem:[#allocation8 + $0x50] sm:$0xf]
        %v420 = vld [vmem:[#allocation8 + $0x54] sm:$0xff]
        %v421 = vld [vmem:[#allocation8 + $0x5c] sm:$0xf]
        %v422 = vld [vmem:[#allocation8 + $0x60] sm:$0xff]
        %v423 = vld [vmem:[#allocation8 + $0x68] sm:$0xf]
        %v424 = vld [vmem:[#allocation8 + $0x6c] sm:$0xff]
        %v425 = vld [vmem:[#allocation8 + $0x74] sm:$0xf]
        %v426 = vld [vmem:[#allocation8 + $0x78] sm:$0xff]
        %v427 = vld [vmem:[#allocation8 + $0x80] sm:$0xf]
        %v428 = vld [vmem:[#allocation8 + $0x84] sm:$0xff]
        %v429 = vld [vmem:[#allocation8 + $0x8c] sm:$0xf]
        %v430 = vld [vmem:[#allocation8 + $0x90] sm:$0xff]
        %v431 = vld [vmem:[#allocation8 + $0x98] sm:$0xf]
        %v432 = vld [vmem:[#allocation8 + $0x9c] sm:$0xff]
        %v433 = vld [vmem:[#allocation8 + $0xa4] sm:$0xf]
        %v434 = vld [vmem:[#allocation8 + $0xa8] sm:$0xff]
        %v435 = vld [vmem:[#allocation8 + $0xb0] sm:$0xf]
        %v436 = vld [vmem:[#allocation8 + $0xb4] sm:$0xff]
        %v437 = vld [vmem:[#allocation8 + $0xbc] sm:$0xf]
        %v438 = vld [vmem:[%s4] sm:$0x7]
        %v440 = vlaneseq
        %v441 = vshrl.u32 %v440, 7
        %v442 = vsub.s32 0, %v441
        %v443 = vrot.slane %v438, %v442
        %v444 = vlaneseq
        %v445 = vshrl.u32 %v444, 7
        %v446 = vsub.s32 1, %v445
        %v447 = vrot.slane %v438, %v446
        %v448 = vlaneseq
        %v449 = vshrl.u32 %v448, 7
        %v450 = vsub.s32 2, %v449
        %v451 = vrot.slane %v438, %v450
        %v487 = vunpack.c.l.b16 %v406
        %v488 = vunpack.c.h.b16 %v406
        %v489 = vunpack.c.l.b16 %v407
        %v490 = vunpack.c.l.b16 %v408
        %v491 = vunpack.c.h.b16 %v408
        %v492 = vunpack.c.l.b16 %v409
        %v493 = vunpack.c.l.b16 %v410
        %v494 = vunpack.c.h.b16 %v410
        %v495 = vunpack.c.l.b16 %v411
        %v496 = vunpack.c.l.b16 %v412
        %v497 = vunpack.c.h.b16 %v412
        %v498 = vunpack.c.l.b16 %v413
        %v499 = vunpack.c.l.b16 %v414
        %v500 = vunpack.c.h.b16 %v414
        %v501 = vunpack.c.l.b16 %v415
        %v502 = vunpack.c.l.b16 %v416
        %v503 = vunpack.c.h.b16 %v416
        %v504 = vunpack.c.l.b16 %v417
        %v505 = vunpack.c.l.b16 %v418
        %v506 = vunpack.c.h.b16 %v418
        %v507 = vunpack.c.l.b16 %v419
        %v508 = vunpack.c.l.b16 %v420
        %v509 = vunpack.c.h.b16 %v420
        %v510 = vunpack.c.l.b16 %v421
        %v511 = vunpack.c.l.b16 %v422
        %v512 = vunpack.c.h.b16 %v422
        %v513 = vunpack.c.l.b16 %v423
        %v514 = vunpack.c.l.b16 %v424
        %v515 = vunpack.c.h.b16 %v424
        %v516 = vunpack.c.l.b16 %v425
        %v517 = vunpack.c.l.b16 %v426
        %v518 = vunpack.c.h.b16 %v426
        %v519 = vunpack.c.l.b16 %v427
        %v520 = vunpack.c.l.b16 %v428
        %v521 = vunpack.c.h.b16 %v428
        %v522 = vunpack.c.l.b16 %v429
        %v523 = vunpack.c.l.b16 %v430
        %v524 = vunpack.c.h.b16 %v430
        %v525 = vunpack.c.l.b16 %v431
        %v526 = vunpack.c.l.b16 %v432
        %v527 = vunpack.c.h.b16 %v432
        %v528 = vunpack.c.l.b16 %v433
        %v529 = vunpack.c.l.b16 %v434
        %v530 = vunpack.c.h.b16 %v434
        %v531 = vunpack.c.l.b16 %v435
        %v532 = vunpack.c.l.b16 %v436
        %v533 = vunpack.c.h.b16 %v436
        %v534 = vunpack.c.l.b16 %v437
        %v535 = vpack.c.b16 %v490, %v487
        %v536 = vpack.c.b16 %v491, %v488
        %v537 = vpack.c.b16 %v492, %v489
        %v538 = vpack.c.b16 %v496, %v493
        %v539 = vpack.c.b16 %v497, %v494
        %v540 = vpack.c.b16 %v498, %v495
        %v541 = vpack.c.b16 %v502, %v499
        %v542 = vpack.c.b16 %v503, %v500
        %v543 = vpack.c.b16 %v504, %v501
        %v544 = vpack.c.b16 %v508, %v505
        %v545 = vpack.c.b16 %v509, %v506
        %v546 = vpack.c.b16 %v510, %v507
        %v547 = vpack.c.b16 %v514, %v511
        %v548 = vpack.c.b16 %v515, %v512
        %v549 = vpack.c.b16 %v516, %v513
        %v550 = vpack.c.b16 %v520, %v517
        %v551 = vpack.c.b16 %v521, %v518
        %v552 = vpack.c.b16 %v522, %v519
        %v553 = vpack.c.b16 %v526, %v523
        %v554 = vpack.c.b16 %v527, %v524
        %v555 = vpack.c.b16 %v528, %v525
        %v556 = vpack.c.b16 %v532, %v529
        %v557 = vpack.c.b16 %v533, %v530
        %v558 = vpack.c.b16 %v534, %v531
        %583 = vmatprep.subr.bf16.mxu0 %v557
        %584 = vmatpush1.bf16.msra.mxu0 %v556
        %585 = vmatprep.subr.bf16.mxu0 %v554
        %586 = vmatpush1.bf16.msra.mxu0 %v553
        %587 = vmatprep.subr.bf16.mxu0 %v551
        %588 = vmatpush1.bf16.msra.mxu0 %v550
        %589 = vmatprep.subr.bf16.mxu0 %v548
        %590 = vmatpush1.bf16.msra.mxu0 %v547
        %591 = vmatprep.subr.bf16.mxu0 %v545
        %592 = vmatpush1.bf16.msra.mxu0 %v544
        %593 = vmatprep.subr.bf16.mxu0 %v542
        %594 = vmatpush1.bf16.msra.mxu0 %v541
        %595 = vmatprep.subr.bf16.mxu0 %v539
        %596 = vmatpush1.bf16.msra.mxu0 %v538
        %597 = vmatprep.subr.bf16.mxu0 %v536
        %598 = vmatpush1.bf16.msra.mxu0 %v535
        %599 = vmatprep.subr.bf16.mxu0 0
        %600 = vmatpush2.bf16.msra.mxu0 0
        %601 = vmatprep.subr.bf16.mxu0 0
        %602 = vmatpush2.bf16.msra.mxu0 0
        %603 = vmatprep.subr.bf16.mxu0 0
        %604 = vmatpush2.bf16.msra.mxu0 0
        %605 = vmatprep.subr.bf16.mxu0 0
        %606 = vmatpush2.bf16.msra.mxu0 0
        %607 = vmatprep.subr.bf16.mxu0 0
        %608 = vmatpush2.bf16.msra.mxu0 0
        %609 = vmatprep.subr.bf16.mxu0 0
        %610 = vmatpush2.bf16.msra.mxu0 0
        %611 = vmatprep.subr.bf16.mxu0 0
        %612 = vmatpush2.bf16.msra.mxu0 0
        %613 = vmatprep.subr.bf16.mxu0 0
        %614 = vmatpush2.bf16.msra.mxu0 0
        %615 = vmatprep.mubr.bf16.mxu0 0
        %616 = vmatmul.mubr.bf16.gmra.mxu0 %v405
        %v617 = vpop.f32.mrf.mxu0
        %v618 = vadd.f32 %v443, %v617
        %v619 = vpop.f32.mrf.mxu0
        %v620 = vadd.f32 %v447, %v619
        %v621 = vpop.f32.mrf.mxu0
        %v622 = vpop.f32.mrf.mxu0
        %623 = vdwg.mxu0
        %624 = vmatprep.subr.bf16.mxu0 0
        %625 = vmatpush1.bf16.msra.mxu0 %v558
        %626 = vmatprep.subr.bf16.mxu0 0
        %627 = vmatpush1.bf16.msra.mxu0 %v555
        %628 = vmatprep.subr.bf16.mxu0 0
        %629 = vmatpush1.bf16.msra.mxu0 %v552
        %630 = vmatprep.subr.bf16.mxu0 0
        %631 = vmatpush1.bf16.msra.mxu0 %v549
        %632 = vmatprep.subr.bf16.mxu0 0
        %633 = vmatpush1.bf16.msra.mxu0 %v546
        %634 = vmatprep.subr.bf16.mxu0 0
        %635 = vmatpush1.bf16.msra.mxu0 %v543
        %636 = vmatprep.subr.bf16.mxu0 0
        %637 = vmatpush1.bf16.msra.mxu0 %v540
        %638 = vmatprep.subr.bf16.mxu0 0
        %639 = vmatpush1.bf16.msra.mxu0 %v537
        %640 = vmatprep.subr.bf16.mxu0 0
        %641 = vmatpush2.bf16.msra.mxu0 0
        %642 = vmatprep.subr.bf16.mxu0 0
        %643 = vmatpush2.bf16.msra.mxu0 0
        %644 = vmatprep.subr.bf16.mxu0 0
        %645 = vmatpush2.bf16.msra.mxu0 0
        %646 = vmatprep.subr.bf16.mxu0 0
        %647 = vmatpush2.bf16.msra.mxu0 0
        %648 = vmatprep.subr.bf16.mxu0 0
        %649 = vmatpush2.bf16.msra.mxu0 0
        %650 = vmatprep.subr.bf16.mxu0 0
        %651 = vmatpush2.bf16.msra.mxu0 0
        %652 = vmatprep.subr.bf16.mxu0 0
        %653 = vmatpush2.bf16.msra.mxu0 0
        %654 = vmatprep.subr.bf16.mxu0 0
        %655 = vmatpush2.bf16.msra.mxu0 0
        %656 = vmatprep.mubr.bf16.mxu0 0
        %657 = vmatmul.mubr.bf16.gmra.mxu0 %v405
        %v658 = vpop.f32.mrf.mxu0
        %v659 = vadd.f32 %v451, %v658
        %v660 = vpop.f32.mrf.mxu0
        %v661 = vpop.f32.mrf.mxu0
        %v662 = vpop.f32.mrf.mxu0
        %663 = vdwg.mxu0
        %v664 = vld [vmem:[#allocation10] sm:$0xff]
        %v665 = vld [vmem:[#allocation10 + $0x8] sm:$0xff]
        %v666 = vld [vmem:[#allocation10 + $0x10] sm:$0xff]
        %v667 = vld [vmem:[#allocation10 + $0x18] sm:$0xff]
        %v668 = vld [vmem:[#allocation10 + $0x20] sm:$0xff]
        %v669 = vld [vmem:[#allocation10 + $0x28] sm:$0xff]
        %v670 = vld [vmem:[#allocation10 + $0x30] sm:$0xff]
        %v671 = vld [vmem:[#allocation10 + $0x38] sm:$0xff]
        %v672 = vld [vmem:[#allocation10 + $0x40] sm:$0xff]
        %v673 = vld [vmem:[#allocation10 + $0x48] sm:$0xff]
        %v674 = vld [vmem:[#allocation10 + $0x50] sm:$0xff]
        %v675 = vld [vmem:[#allocation10 + $0x58] sm:$0xff]
        %v676 = vld [vmem:[#allocation10 + $0x60] sm:$0xff]
        %v677 = vld [vmem:[#allocation10 + $0x68] sm:$0xff]
        %v678 = vld [vmem:[#allocation10 + $0x70] sm:$0xff]
        %v679 = vld [vmem:[#allocation10 + $0x78] sm:$0xff]
        %680 = vmatprep.subr.mxu0 0.0
        %681 = vmatpush1.msra.mxu0 %v679
        %682 = vmatprep.subr.mxu0 0.0
        %683 = vmatpush1.msra.mxu0 %v678
        %684 = vmatprep.subr.mxu0 0.0
        %685 = vmatpush1.msra.mxu0 %v677
        %686 = vmatprep.subr.mxu0 0.0
        %687 = vmatpush1.msra.mxu0 %v676
        %688 = vmatprep.subr.mxu0 0.0
        %689 = vmatpush1.msra.mxu0 %v675
        %690 = vmatprep.subr.mxu0 0.0
        %691 = vmatpush1.msra.mxu0 %v674
        %692 = vmatprep.subr.mxu0 0.0
        %693 = vmatpush1.msra.mxu0 %v673
        %694 = vmatprep.subr.mxu0 0.0
        %695 = vmatpush1.msra.mxu0 %v672
        %696 = vmatprep.subr.mxu0 0.0
        %697 = vmatpush1.msra.mxu0 %v671
        %698 = vmatprep.subr.mxu0 0.0
        %699 = vmatpush1.msra.mxu0 %v670
        %700 = vmatprep.subr.mxu0 0.0
        %701 = vmatpush1.msra.mxu0 %v669
        %702 = vmatprep.subr.mxu0 0.0
        %703 = vmatpush1.msra.mxu0 %v668
        %704 = vmatprep.subr.mxu0 0.0
        %705 = vmatpush1.msra.mxu0 %v667
        %706 = vmatprep.subr.mxu0 0.0
        %707 = vmatpush1.msra.mxu0 %v666
        %708 = vmatprep.subr.mxu0 0.0
        %709 = vmatpush1.msra.mxu0 %v665
        %710 = vmatprep.subr.mxu0 0.0
        %711 = vmatpush1.msra.mxu0 %v664
        %712 = vmatprep.subr.mxu0 0.0
        %713 = vmatpush2.msra.mxu0 0.0
        %714 = vmatprep.subr.mxu0 0.0
        %715 = vmatpush2.msra.mxu0 0.0
        %716 = vmatprep.subr.mxu0 0.0
        %717 = vmatpush2.msra.mxu0 0.0
        %718 = vmatprep.subr.mxu0 0.0
        %719 = vmatpush2.msra.mxu0 0.0
        %720 = vmatprep.subr.mxu0 0.0
        %721 = vmatpush2.msra.mxu0 0.0
        %722 = vmatprep.subr.mxu0 0.0
        %723 = vmatpush2.msra.mxu0 0.0
        %724 = vmatprep.subr.mxu0 0.0
        %725 = vmatpush2.msra.mxu0 0.0
        %726 = vmatprep.subr.mxu0 0.0
        %727 = vmatpush2.msra.mxu0 0.0
        %728 = vmatprep.subr.mxu0 0.0
        %729 = vmatpush2.msra.mxu0 0.0
        %730 = vmatprep.subr.mxu0 0.0
        %731 = vmatpush2.msra.mxu0 0.0
        %732 = vmatprep.subr.mxu0 0.0
        %733 = vmatpush2.msra.mxu0 0.0
        %734 = vmatprep.subr.mxu0 0.0
        %735 = vmatpush2.msra.mxu0 0.0
        %736 = vmatprep.subr.mxu0 0.0
        %737 = vmatpush2.msra.mxu0 0.0
        %738 = vmatprep.subr.mxu0 0.0
        %739 = vmatpush2.msra.mxu0 0.0
        %740 = vmatprep.subr.mxu0 0.0
        %741 = vmatpush2.msra.mxu0 0.0
        %742 = vmatprep.subr.mxu0 0.0
        %743 = vmatpush2.msra.mxu0 0.0
        %744 = vmatprep.mubr.f32.mxu0 0.0
        %745 = vmatmul.mubr.f32.gmra.mxu0 %v618
        %v746 = vpop.f32.mrf.mxu0
        %v747 = vadd.f32 0.0, %v746
        %v748 = vpop.f32.mrf.mxu0
        %749 = vdwg.mxu0
        %v750 = vsub.f32 %v618, %v747
        %v751 = vmul.f32 %v750, %v750
        %752 = vmatprep.subr.mxu0 0.0
        %753 = vmatpush1.msra.mxu0 %v679
        %754 = vmatprep.subr.mxu0 0.0
        %755 = vmatpush1.msra.mxu0 %v678
        %756 = vmatprep.subr.mxu0 0.0
        %757 = vmatpush1.msra.mxu0 %v677
        %758 = vmatprep.subr.mxu0 0.0
        %759 = vmatpush1.msra.mxu0 %v676
        %760 = vmatprep.subr.mxu0 0.0
        %761 = vmatpush1.msra.mxu0 %v675
        %762 = vmatprep.subr.mxu0 0.0
        %763 = vmatpush1.msra.mxu0 %v674
        %764 = vmatprep.subr.mxu0 0.0
        %765 = vmatpush1.msra.mxu0 %v673
        %766 = vmatprep.subr.mxu0 0.0
        %767 = vmatpush1.msra.mxu0 %v672
        %768 = vmatprep.subr.mxu0 0.0
        %769 = vmatpush1.msra.mxu0 %v671
        %770 = vmatprep.subr.mxu0 0.0
        %771 = vmatpush1.msra.mxu0 %v670
        %772 = vmatprep.subr.mxu0 0.0
        %773 = vmatpush1.msra.mxu0 %v669
        %774 = vmatprep.subr.mxu0 0.0
        %775 = vmatpush1.msra.mxu0 %v668
        %776 = vmatprep.subr.mxu0 0.0
        %777 = vmatpush1.msra.mxu0 %v667
        %778 = vmatprep.subr.mxu0 0.0
        %779 = vmatpush1.msra.mxu0 %v666
        %780 = vmatprep.subr.mxu0 0.0
        %781 = vmatpush1.msra.mxu0 %v665
        %782 = vmatprep.subr.mxu0 0.0
        %783 = vmatpush1.msra.mxu0 %v664
        %784 = vmatprep.subr.mxu0 0.0
        %785 = vmatpush2.msra.mxu0 0.0
        %786 = vmatprep.subr.mxu0 0.0
        %787 = vmatpush2.msra.mxu0 0.0
        %788 = vmatprep.subr.mxu0 0.0
        %789 = vmatpush2.msra.mxu0 0.0
        %790 = vmatprep.subr.mxu0 0.0
        %791 = vmatpush2.msra.mxu0 0.0
        %792 = vmatprep.subr.mxu0 0.0
        %793 = vmatpush2.msra.mxu0 0.0
        %794 = vmatprep.subr.mxu0 0.0
        %795 = vmatpush2.msra.mxu0 0.0
        %796 = vmatprep.subr.mxu0 0.0
        %797 = vmatpush2.msra.mxu0 0.0
        %798 = vmatprep.subr.mxu0 0.0
        %799 = vmatpush2.msra.mxu0 0.0
        %800 = vmatprep.subr.mxu0 0.0
        %801 = vmatpush2.msra.mxu0 0.0
        %802 = vmatprep.subr.mxu0 0.0
        %803 = vmatpush2.msra.mxu0 0.0
        %804 = vmatprep.subr.mxu0 0.0
        %805 = vmatpush2.msra.mxu0 0.0
        %806 = vmatprep.subr.mxu0 0.0
        %807 = vmatpush2.msra.mxu0 0.0
        %808 = vmatprep.subr.mxu0 0.0
        %809 = vmatpush2.msra.mxu0 0.0
        %810 = vmatprep.subr.mxu0 0.0
        %811 = vmatpush2.msra.mxu0 0.0
        %812 = vmatprep.subr.mxu0 0.0
        %813 = vmatpush2.msra.mxu0 0.0
        %814 = vmatprep.subr.mxu0 0.0
        %815 = vmatpush2.msra.mxu0 0.0
        %816 = vmatprep.mubr.f32.mxu0 0.0
        %817 = vmatmul.mubr.f32.gmra.mxu0 %v751
        %v818 = vpop.f32.mrf.mxu0
        %v819 = vadd.f32 1e-05, %v818
        %v820 = vpop.f32.mrf.mxu0
        %821 = vdwg.mxu0
        %v822 = vrsqrt.pop %v819
        %v823 = vmul.f32 %v750, %v822
        %v824 = vld [vmem:[%s6] sm:$0x1]
        %v826 = vlaneseq
        %v827 = vshrl.u32 %v826, 7
        %v828 = vsub.s32 0, %v827
        %v829 = vrot.slane %v824, %v828
        %v831 = vmul.f32 %v823, %v829
        %v832 = vld [vmem:[%s7] sm:$0x1]
        %v834 = vlaneseq
        %v835 = vshrl.u32 %v834, 7
        %v836 = vsub.s32 0, %v835
        %v837 = vrot.slane %v832, %v836
        %v839 = vadd.f32 %v831, %v837
        %v840 = vpack.c.bf16 %v839, %v839
        %841 = vst [vmem:[%s374] sm:$0xf] %v840
        %842 = vmatprep.subr.mxu0 0.0
        %843 = vmatpush1.msra.mxu0 %v679
        %844 = vmatprep.subr.mxu0 0.0
        %845 = vmatpush1.msra.mxu0 %v678
        %846 = vmatprep.subr.mxu0 0.0
        %847 = vmatpush1.msra.mxu0 %v677
        %848 = vmatprep.subr.mxu0 0.0
        %849 = vmatpush1.msra.mxu0 %v676
        %850 = vmatprep.subr.mxu0 0.0
        %851 = vmatpush1.msra.mxu0 %v675
        %852 = vmatprep.subr.mxu0 0.0
        %853 = vmatpush1.msra.mxu0 %v674
        %854 = vmatprep.subr.mxu0 0.0
        %855 = vmatpush1.msra.mxu0 %v673
        %856 = vmatprep.subr.mxu0 0.0
        %857 = vmatpush1.msra.mxu0 %v672
        %858 = vmatprep.subr.mxu0 0.0
        %859 = vmatpush1.msra.mxu0 %v671
        %860 = vmatprep.subr.mxu0 0.0
        %861 = vmatpush1.msra.mxu0 %v670
        %862 = vmatprep.subr.mxu0 0.0
        %863 = vmatpush1.msra.mxu0 %v669
        %864 = vmatprep.subr.mxu0 0.0
        %865 = vmatpush1.msra.mxu0 %v668
        %866 = vmatprep.subr.mxu0 0.0
        %867 = vmatpush1.msra.mxu0 %v667
        %868 = vmatprep.subr.mxu0 0.0
        %869 = vmatpush1.msra.mxu0 %v666
        %870 = vmatprep.subr.mxu0 0.0
        %871 = vmatpush1.msra.mxu0 %v665
        %872 = vmatprep.subr.mxu0 0.0
        %873 = vmatpush1.msra.mxu0 %v664
        %874 = vmatprep.subr.mxu0 0.0
        %875 = vmatpush2.msra.mxu0 0.0
        %876 = vmatprep.subr.mxu0 0.0
        %877 = vmatpush2.msra.mxu0 0.0
        %878 = vmatprep.subr.mxu0 0.0
        %879 = vmatpush2.msra.mxu0 0.0
        %880 = vmatprep.subr.mxu0 0.0
        %881 = vmatpush2.msra.mxu0 0.0
        %882 = vmatprep.subr.mxu0 0.0
        %883 = vmatpush2.msra.mxu0 0.0
        %884 = vmatprep.subr.mxu0 0.0
        %885 = vmatpush2.msra.mxu0 0.0
        %886 = vmatprep.subr.mxu0 0.0
        %887 = vmatpush2.msra.mxu0 0.0
        %888 = vmatprep.subr.mxu0 0.0
        %889 = vmatpush2.msra.mxu0 0.0
        %890 = vmatprep.subr.mxu0 0.0
        %891 = vmatpush2.msra.mxu0 0.0
        %892 = vmatprep.subr.mxu0 0.0
        %893 = vmatpush2.msra.mxu0 0.0
        %894 = vmatprep.subr.mxu0 0.0
        %895 = vmatpush2.msra.mxu0 0.0
        %896 = vmatprep.subr.mxu0 0.0
        %897 = vmatpush2.msra.mxu0 0.0
        %898 = vmatprep.subr.mxu0 0.0
        %899 = vmatpush2.msra.mxu0 0.0
        %900 = vmatprep.subr.mxu0 0.0
        %901 = vmatpush2.msra.mxu0 0.0
        %902 = vmatprep.subr.mxu0 0.0
        %903 = vmatpush2.msra.mxu0 0.0
        %904 = vmatprep.subr.mxu0 0.0
        %905 = vmatpush2.msra.mxu0 0.0
        %906 = vmatprep.mubr.f32.mxu0 0.0
        %907 = vmatmul.mubr.f32.gmra.mxu0 %v620
        %v908 = vpop.f32.mrf.mxu0
        %v909 = vadd.f32 0.0, %v908
        %v910 = vpop.f32.mrf.mxu0
        %911 = vdwg.mxu0
        %v912 = vsub.f32 %v620, %v909
        %v913 = vmul.f32 %v912, %v912
        %914 = vmatprep.subr.mxu0 0.0
        %915 = vmatpush1.msra.mxu0 %v679
        %916 = vmatprep.subr.mxu0 0.0
        %917 = vmatpush1.msra.mxu0 %v678
        %918 = vmatprep.subr.mxu0 0.0
        %919 = vmatpush1.msra.mxu0 %v677
        %920 = vmatprep.subr.mxu0 0.0
        %921 = vmatpush1.msra.mxu0 %v676
        %922 = vmatprep.subr.mxu0 0.0
        %923 = vmatpush1.msra.mxu0 %v675
        %924 = vmatprep.subr.mxu0 0.0
        %925 = vmatpush1.msra.mxu0 %v674
        %926 = vmatprep.subr.mxu0 0.0
        %927 = vmatpush1.msra.mxu0 %v673
        %928 = vmatprep.subr.mxu0 0.0
        %929 = vmatpush1.msra.mxu0 %v672
        %930 = vmatprep.subr.mxu0 0.0
        %931 = vmatpush1.msra.mxu0 %v671
        %932 = vmatprep.subr.mxu0 0.0
        %933 = vmatpush1.msra.mxu0 %v670
        %934 = vmatprep.subr.mxu0 0.0
        %935 = vmatpush1.msra.mxu0 %v669
        %936 = vmatprep.subr.mxu0 0.0
        %937 = vmatpush1.msra.mxu0 %v668
        %938 = vmatprep.subr.mxu0 0.0
        %939 = vmatpush1.msra.mxu0 %v667
        %940 = vmatprep.subr.mxu0 0.0
        %941 = vmatpush1.msra.mxu0 %v666
        %942 = vmatprep.subr.mxu0 0.0
        %943 = vmatpush1.msra.mxu0 %v665
        %944 = vmatprep.subr.mxu0 0.0
        %945 = vmatpush1.msra.mxu0 %v664
        %946 = vmatprep.subr.mxu0 0.0
        %947 = vmatpush2.msra.mxu0 0.0
        %948 = vmatprep.subr.mxu0 0.0
        %949 = vmatpush2.msra.mxu0 0.0
        %950 = vmatprep.subr.mxu0 0.0
        %951 = vmatpush2.msra.mxu0 0.0
        %952 = vmatprep.subr.mxu0 0.0
        %953 = vmatpush2.msra.mxu0 0.0
        %954 = vmatprep.subr.mxu0 0.0
        %955 = vmatpush2.msra.mxu0 0.0
        %956 = vmatprep.subr.mxu0 0.0
        %957 = vmatpush2.msra.mxu0 0.0
        %958 = vmatprep.subr.mxu0 0.0
        %959 = vmatpush2.msra.mxu0 0.0
        %960 = vmatprep.subr.mxu0 0.0
        %961 = vmatpush2.msra.mxu0 0.0
        %962 = vmatprep.subr.mxu0 0.0
        %963 = vmatpush2.msra.mxu0 0.0
        %964 = vmatprep.subr.mxu0 0.0
        %965 = vmatpush2.msra.mxu0 0.0
        %966 = vmatprep.subr.mxu0 0.0
        %967 = vmatpush2.msra.mxu0 0.0
        %968 = vmatprep.subr.mxu0 0.0
        %969 = vmatpush2.msra.mxu0 0.0
        %970 = vmatprep.subr.mxu0 0.0
        %971 = vmatpush2.msra.mxu0 0.0
        %972 = vmatprep.subr.mxu0 0.0
        %973 = vmatpush2.msra.mxu0 0.0
        %974 = vmatprep.subr.mxu0 0.0
        %975 = vmatpush2.msra.mxu0 0.0
        %976 = vmatprep.subr.mxu0 0.0
        %977 = vmatpush2.msra.mxu0 0.0
        %978 = vmatprep.mubr.f32.mxu0 0.0
        %979 = vmatmul.mubr.f32.gmra.mxu0 %v913
        %v980 = vpop.f32.mrf.mxu0
        %v981 = vadd.f32 1e-05, %v980
        %v982 = vpop.f32.mrf.mxu0
        %983 = vdwg.mxu0
        %v984 = vrsqrt.pop %v981
        %v985 = vmul.f32 %v912, %v984
        %v986 = vld [vmem:[%s6 + $0x1] sm:$0x1]
        %v988 = vlaneseq
        %v989 = vshrl.u32 %v988, 7
        %v990 = vsub.s32 0, %v989
        %v991 = vrot.slane %v986, %v990
        %v993 = vmul.f32 %v985, %v991
        %v994 = vld [vmem:[%s7 + $0x1] sm:$0x1]
        %v996 = vlaneseq
        %v997 = vshrl.u32 %v996, 7
        %v998 = vsub.s32 0, %v997
        %v999 = vrot.slane %v994, %v998
        %v1001 = vadd.f32 %v993, %v999
        %v1002 = vpack.c.bf16 %v1001, %v1001
        %1003 = vst [vmem:[%s374 + $0x4] sm:$0xf] %v1002
        %v1004 = vpack.c.bf16 %v659, %v659
        %1005 = vst [vmem:[%s374 + $0x8] sm:$0xf] %v1004
        %s1006 = sand.u32 %s208, 1
        %s1007 = scalar_lea.sflag [#allocation4], %s1006
        %s1008 = sand.u32 %s208, 1
        %s1009 = smul.addr %s1008, 12
        %s1010 = scalar_lea.vmem [#allocation11], %s1009
        // Predicated region
        $region73: #{tpu_custom_call.1} parent=51 // pred_check
          %p1011 = pneg %p218
        $region74: #{tpu_custom_call.1} parent=51 // pred_check_branch
          %1013 = sbr.rel (%p1011) target = $region76
        $region75: #{tpu_custom_call.1} parent=51 // pred_region
          %s1015 = ssub.s32 192, 192
          %1016 = vsyncadd %s1007, %s1015
          %s1017 = smul.addr %s27, 3
          %s1018 = smul.addr %s1017, 64
          %s1019 = scalar_lea.hbm %s8, %s1018
          %s1021 = sshll.u32 %s1010, 4
          %s1022 = int_to_ptr.vmem [resolvable:$true] %s1021
          %1024 = dma.vmem_to_hbm [thread:$0]  %s1022, 192, %s1019, %s1007
        $region76: #{tpu_custom_call.1} parent=51 // pred_fallthru
          _
      $region52: #{tpu_custom_call.1} parent=5 // pred_fallthru
        _
      %p1025 = scmp.le.s32.totalorder 2, %s22
      // Predicated region
      $region77: #{tpu_custom_call.1} parent=5 // pred_check
        %p1026 = pneg %p1025
      $region78: #{tpu_custom_call.1} parent=5 // pred_check_branch
        %1028 = sbr.rel (%p1026) target = $region80
      $region79: #{tpu_custom_call.1} parent=5 // pred_region
        %s1029 = ssub.s32 %s22, 2
        // Predicated region
        $region81: #{tpu_custom_call.1} parent=79 // pred_check
          %p1030 = pneg %p224
        $region82: #{tpu_custom_call.1} parent=79 // pred_check_branch
          %1032 = sbr.rel (%p1030) target = $region84
        $region83: #{tpu_custom_call.1} parent=79 // pred_region
          %s1033 = sand.u32 %s209, 1
          %s1034 = scalar_lea.sflag [#allocation4], %s1033
          %s1035 = sand.u32 %s209, 1
          %s1036 = smul.addr %s1035, 12
          %s1037 = scalar_lea.vmem [#allocation11], %s1036
          %1038 = dma.done %s1034, 192
        $region84: #{tpu_custom_call.1} parent=79 // pred_fallthru
          _
      $region80: #{tpu_custom_call.1} parent=5 // pred_fallthru
        _
    $region6: #{tpu_custom_call.1} parent=1 // loop_footer
      %s26 = sadd.s32 1, %s22
    $region7: #{tpu_custom_call.1} parent=1 // loop_footer_branch
      %21 = sbr.rel target = $region3
    $region8: #{tpu_custom_call.1} parent=1 // loop_exit
      _
    %1039 = vsyncpa [#allocation3], 1
    %s1040 = scalar_lea.sflag [#allocation3], 1
    %1041 = vsyncpa %s1040, 1
    %1042 = vsyncpa [#allocation6], 1
    %1043 = vsyncpa [#allocation9], 1
    %1044 = vsyncpa [#allocation4], 1
    %s1045 = scalar_lea.sflag [#allocation4], 1
    %1046 = vsyncpa %s1045, 1

</llo_original>
